<compile_context>
chip_gen: v7x
topology: tpu7x:2x2x1
jax: 0.10.0
libtpu: 0.0.40
codegen_flags: <defaults>
</compile_context>

<pallas_src>
import jax
import jax.numpy as jnp
from jax.experimental import pallas as pl
from jax.experimental.pallas import tpu as pltpu


def mlp_kernel(xt_ref,
               w1_ref, b1_ref,
               w2_ref, b2_ref,
               w3_ref, b3_ref,
               w4_ref, b4_ref,
               o_ref):
    # xt_ref: (2, tb)   batch on lanes
    xt = xt_ref[...]

    # fl1 (in=2): two VPU broadcast-FMAs instead of a 2-row MXU matmul.
    h = (w1_ref[:, 0:1] * xt[0:1, :]
         + w1_ref[:, 1:2] * xt[1:2, :]
         + b1_ref[...])                                   # (64, tb)
    h = jnp.maximum(h, 0.0)

    # fl2 + ReLU (MXU): (128, 64) @ (64, tb)
    h = jnp.dot(w2_ref[...], h, preferred_element_type=jnp.float32)
    h = jnp.maximum(h + b2_ref[...], 0.0)                 # (128, tb)

    # fl3 + ReLU (MXU): (64, 128) @ (128, tb)
    h = jnp.dot(w3_ref[...], h, preferred_element_type=jnp.float32)
    h = jnp.maximum(h + b3_ref[...], 0.0)                 # (64, tb)

    # output (out=1): VPU multiply + sublane reduce -> lane-dense (1, tb).
    z = jnp.sum(h * w4_ref[...], axis=0, keepdims=True) + b4_ref[...]
    o_ref[...] = jax.nn.sigmoid(z)                        # (1, tb)


def _round_up(v, m):
    return ((v + m - 1) // m) * m


def net_forward(x, params, *, tb=512):
    """x: [B, 2] float32 -> [B, 1] float32 (sigmoid output)."""
    (w1, b1), (w2, b2), (w3, b3), (w4, b4) = params
    B, F_in = x.shape
    assert F_in == w1.shape[0] == 2

    # Batch tile: big tiles amortize per-grid-step overhead, keep it a
    # multiple of 128 (lane-dense stores), and keep >= 2 grid steps when the
    # batch allows it so v7x's two TensorCores both get work.
    if B <= 128:
        tb_eff = 128
    else:
        tb_eff = min(_round_up(tb, 128), _round_up(pl.cdiv(B, 2), 128))
    Bp = _round_up(B, tb_eff)

    # Feature-major input; zero-pad the batch (padded columns are computed
    # and sliced away below -- they never contaminate valid rows).
    xt = x.T                                              # (2, B)
    if Bp != B:
        xt = jnp.pad(xt, ((0, 0), (0, Bp - B)))

    # Kernel-side layouts: weights as [out, in] (PyTorch layout), biases as
    # columns, so the kernel computes y.T = W @ x.T + b.
    w1k, b1k = w1.T, b1.T                                 # (64, 2), (64, 1)
    w2k, b2k = w2.T, b2.T                                 # (128, 64), (128, 1)
    w3k, b3k = w3.T, b3.T                                 # (64, 128), (64, 1)
    w4k, b4k = w4, b4                                     # (64, 1), (1, 1)

    grid = (Bp // tb_eff,)

    def full_spec(arr):
        # Whole weight/bias resident in VMEM every step; constant index_map
        # means Pallas does not re-DMA it across grid steps.
        return pl.BlockSpec(arr.shape, lambda i: (0,) * arr.ndim)

    out_t = pl.pallas_call(
        mlp_kernel,
        out_shape=jax.ShapeDtypeStruct((1, Bp), jnp.float32),
        grid_spec=pltpu.PrefetchScalarGridSpec(
            num_scalar_prefetch=0,
            grid=grid,
            in_specs=[
                pl.BlockSpec((F_in, tb_eff), lambda i: (0, i)),  # x.T tile
                full_spec(w1k), full_spec(b1k),
                full_spec(w2k), full_spec(b2k),
                full_spec(w3k), full_spec(b3k),
                full_spec(w4k), full_spec(b4k),
            ],
            out_specs=pl.BlockSpec((1, tb_eff), lambda i: (0, i)),
        ),
        compiler_params=pltpu.CompilerParams(
            dimension_semantics=("parallel",)),
    )(xt, w1k, b1k, w2k, b2k, w3k, b3k, w4k, b4k)

    return out_t[0, :B].reshape(B, 1)


def init_params(key):
    """Deterministic synthetic parameters matching Net.__init__ shapes.

    PyTorch Linear(in, out) stores weight [out, in]; here weights are kept as
    [in, out] (so y = x @ W + b) and biases as [1, out].
    """
    dims = [(2, 64), (64, 128), (128, 64), (64, 1)]
    params = []
    for (fin, fout) in dims:
        key, kw, kb = jax.random.split(key, 3)
        bound = 1.0 / jnp.sqrt(fin)
        w = jax.random.uniform(kw, (fin, fout), jnp.float32, -bound, bound)
        b = jax.random.uniform(kb, (1, fout), jnp.float32, -bound, bound)
        params.append((w, b))
    return params


def net_ref(x, params):
    """Pure-JAX reference, mathematically identical to the PyTorch forward.

    The K=2 first layer and N=1 output layer are written in the same exact-f32
    broadcast-FMA / multiply-reduce form as the kernel (identical math to the
    corresponding matmuls), so the comparison isolates kernel/layout bugs
    rather than matmul precision-mode differences.
    """
    (w1, b1), (w2, b2), (w3, b3), (w4, b4) = params
    h = jnp.maximum(x[:, 0:1] * w1[0:1, :] + x[:, 1:2] * w1[1:2, :] + b1, 0.0)
    h = jnp.maximum(jnp.dot(h, w2, preferred_element_type=jnp.float32) + b2, 0.0)
    h = jnp.maximum(jnp.dot(h, w3, preferred_element_type=jnp.float32) + b3, 0.0)
    z = jnp.sum(h * w4[:, 0][None, :], axis=-1, keepdims=True) + b4
    return jax.nn.sigmoid(z)


if __name__ == "__main__":
    key = jax.random.PRNGKey(0)
    key, kx = jax.random.split(key)
    params = init_params(key)

    # Main case: batch large enough for 2 grid steps of 512 (lane-dense tiles,
    # both v7x TensorCores usable).
    B = 1024
    x = jax.random.normal(kx, (B, 2), jnp.float32)
    out = jax.block_until_ready(net_forward(x, params))
    ref = net_ref(x, params)
    assert out.shape == (B, 1), out.shape
    assert jnp.allclose(out, ref, atol=1e-4, rtol=1e-4), (
        float(jnp.max(jnp.abs(out - ref))))

    # Ragged-batch case: exercises zero-padding + the single-tile path.
    B2 = 10
    x2 = jax.random.normal(jax.random.PRNGKey(1), (B2, 2), jnp.float32)
    out2 = jax.block_until_ready(net_forward(x2, params))
    ref2 = net_ref(x2, params)
    assert out2.shape == (B2, 1), out2.shape
    assert jnp.allclose(out2, ref2, atol=1e-4, rtol=1e-4), (
        float(jnp.max(jnp.abs(out2 - ref2))))

    print("KERNEL_OK")
</pallas_src>

<mosaic_0001>
module attributes {stable_mosaic.version = 11 : i64} {
  func.func @mlp_kernel(%arg0: i32, %arg1: memref<2x512xf32, #tpu.memory_space<vmem>>, %arg2: memref<64x2xf32, #tpu.memory_space<vmem>>, %arg3: memref<64x1xf32, #tpu.memory_space<vmem>>, %arg4: memref<128x64xf32, #tpu.memory_space<vmem>>, %arg5: memref<128x1xf32, #tpu.memory_space<vmem>>, %arg6: memref<64x128xf32, #tpu.memory_space<vmem>>, %arg7: memref<64x1xf32, #tpu.memory_space<vmem>>, %arg8: memref<64x1xf32, #tpu.memory_space<vmem>>, %arg9: memref<1x1xf32, #tpu.memory_space<vmem>>, %arg10: memref<1x512xf32, #tpu.memory_space<vmem>>) attributes {dimension_semantics = [#tpu.dimension_semantics<parallel>], iteration_bounds = array<i64: 2>, scalar_prefetch = 0 : i64, scratch_operands = 0 : i64, tpu.core_type = #tpu.core_type<tc>, window_params = [{transform_indices = @transform_0, window_bounds = array<i64: 2, 512>}, {pipeline_mode = #tpu.pipeline_mode<synchronous>, transform_indices = @transform_1, window_bounds = array<i64: 64, 2>}, {pipeline_mode = #tpu.pipeline_mode<synchronous>, transform_indices = @transform_2, window_bounds = array<i64: 64, 1>}, {pipeline_mode = #tpu.pipeline_mode<synchronous>, transform_indices = @transform_3, window_bounds = array<i64: 128, 64>}, {pipeline_mode = #tpu.pipeline_mode<synchronous>, transform_indices = @transform_4, window_bounds = array<i64: 128, 1>}, {pipeline_mode = #tpu.pipeline_mode<synchronous>, transform_indices = @transform_5, window_bounds = array<i64: 64, 128>}, {pipeline_mode = #tpu.pipeline_mode<synchronous>, transform_indices = @transform_6, window_bounds = array<i64: 64, 1>}, {pipeline_mode = #tpu.pipeline_mode<synchronous>, transform_indices = @transform_7, window_bounds = array<i64: 64, 1>}, {pipeline_mode = #tpu.pipeline_mode<synchronous>, transform_indices = @transform_8, window_bounds = array<i64: 1, 1>}, {transform_indices = @transform_9, window_bounds = array<i64: 1, 512>}]} {
    %c0 = arith.constant 0 : index
    %c0_0 = arith.constant 0 : index
    %0 = vector.load %arg1[%c0, %c0_0] : memref<2x512xf32, #tpu.memory_space<vmem>>, vector<2x512xf32>
    %c0_1 = arith.constant 0 : index
    %c0_2 = arith.constant 0 : index
    %1 = vector.load %arg2[%c0_1, %c0_2] : memref<64x2xf32, #tpu.memory_space<vmem>>, vector<64x1xf32>
    %2 = vector.extract_strided_slice %0 {offsets = [0, 0], sizes = [1, 512], strides = [1, 1]} : vector<2x512xf32> to vector<1x512xf32>
    %3 = vector.broadcast %1 : vector<64x1xf32> to vector<64x512xf32>
    %4 = vector.broadcast %2 : vector<1x512xf32> to vector<64x512xf32>
    %5 = arith.mulf %3, %4 : vector<64x512xf32>
    %c0_3 = arith.constant 0 : index
    %c1 = arith.constant 1 : index
    %6 = vector.load %arg2[%c0_3, %c1] : memref<64x2xf32, #tpu.memory_space<vmem>>, vector<64x1xf32>
    %7 = vector.extract_strided_slice %0 {offsets = [1, 0], sizes = [1, 512], strides = [1, 1]} : vector<2x512xf32> to vector<1x512xf32>
    %8 = vector.broadcast %6 : vector<64x1xf32> to vector<64x512xf32>
    %9 = vector.broadcast %7 : vector<1x512xf32> to vector<64x512xf32>
    %10 = arith.mulf %8, %9 : vector<64x512xf32>
    %11 = arith.addf %5, %10 : vector<64x512xf32>
    %c0_4 = arith.constant 0 : index
    %c0_5 = arith.constant 0 : index
    %12 = vector.load %arg3[%c0_4, %c0_5] : memref<64x1xf32, #tpu.memory_space<vmem>>, vector<64x1xf32>
    %13 = vector.broadcast %12 : vector<64x1xf32> to vector<64x512xf32>
    %14 = arith.addf %11, %13 : vector<64x512xf32>
    %cst = arith.constant 0.000000e+00 : f32
    %15 = vector.broadcast %cst : f32 to vector<64x512xf32>
    %16 = arith.maximumf %14, %15 : vector<64x512xf32>
    %c0_6 = arith.constant 0 : index
    %c0_7 = arith.constant 0 : index
    %17 = vector.load %arg4[%c0_6, %c0_7] : memref<128x64xf32, #tpu.memory_space<vmem>>, vector<128x64xf32>
    %cst_8 = arith.constant dense<0.000000e+00> : vector<128x512xf32>
    %18 = tpu.matmul %17, %16, %cst_8 {dimension_numbers = #tpu.dot_dimension_numbers<[1], [0], [0], [1], [0, 0, 1, 1], [], []>} : vector<128x64xf32>, vector<64x512xf32>, vector<128x512xf32> -> vector<128x512xf32>
    %c0_9 = arith.constant 0 : index
    %c0_10 = arith.constant 0 : index
    %19 = vector.load %arg5[%c0_9, %c0_10] : memref<128x1xf32, #tpu.memory_space<vmem>>, vector<128x1xf32>
    %20 = vector.broadcast %19 : vector<128x1xf32> to vector<128x512xf32>
    %21 = arith.addf %18, %20 : vector<128x512xf32>
    %cst_11 = arith.constant 0.000000e+00 : f32
    %22 = vector.broadcast %cst_11 : f32 to vector<128x512xf32>
    %23 = arith.maximumf %21, %22 : vector<128x512xf32>
    %c0_12 = arith.constant 0 : index
    %c0_13 = arith.constant 0 : index
    %24 = vector.load %arg6[%c0_12, %c0_13] : memref<64x128xf32, #tpu.memory_space<vmem>>, vector<64x128xf32>
    %cst_14 = arith.constant dense<0.000000e+00> : vector<64x512xf32>
    %25 = tpu.matmul %24, %23, %cst_14 {dimension_numbers = #tpu.dot_dimension_numbers<[1], [0], [0], [1], [0, 0, 1, 1], [], []>} : vector<64x128xf32>, vector<128x512xf32>, vector<64x512xf32> -> vector<64x512xf32>
    %c0_15 = arith.constant 0 : index
    %c0_16 = arith.constant 0 : index
    %26 = vector.load %arg7[%c0_15, %c0_16] : memref<64x1xf32, #tpu.memory_space<vmem>>, vector<64x1xf32>
    %27 = vector.broadcast %26 : vector<64x1xf32> to vector<64x512xf32>
    %28 = arith.addf %25, %27 : vector<64x512xf32>
    %cst_17 = arith.constant 0.000000e+00 : f32
    %29 = vector.broadcast %cst_17 : f32 to vector<64x512xf32>
    %30 = arith.maximumf %28, %29 : vector<64x512xf32>
    %c0_18 = arith.constant 0 : index
    %c0_19 = arith.constant 0 : index
    %31 = vector.load %arg8[%c0_18, %c0_19] : memref<64x1xf32, #tpu.memory_space<vmem>>, vector<64x1xf32>
    %32 = vector.broadcast %31 : vector<64x1xf32> to vector<64x512xf32>
    %33 = arith.mulf %30, %32 : vector<64x512xf32>
    %cst_20 = arith.constant dense<0.000000e+00> : vector<512xf32>
    %34 = vector.multi_reduction <add>, %33, %cst_20 [0] : vector<64x512xf32> to vector<512xf32>
    %35 = vector.shape_cast %34 : vector<512xf32> to vector<1x512xf32>
    %c0_21 = arith.constant 0 : index
    %c0_22 = arith.constant 0 : index
    %36 = vector.load %arg9[%c0_21, %c0_22] : memref<1x1xf32, #tpu.memory_space<vmem>>, vector<1x1xf32>
    %37 = vector.broadcast %36 : vector<1x1xf32> to vector<1x512xf32>
    %38 = arith.addf %35, %37 : vector<1x512xf32>
    %39 = arith.negf %38 : vector<1x512xf32>
    %40 = math.exp %39 : vector<1x512xf32>
    %cst_23 = arith.constant 1.000000e+00 : f32
    %41 = vector.broadcast %cst_23 : f32 to vector<1x512xf32>
    %42 = arith.addf %41, %40 : vector<1x512xf32>
    %43 = arith.divf %41, %42 : vector<1x512xf32>
    %c0_24 = arith.constant 0 : index
    %c0_25 = arith.constant 0 : index
    %44 = vector.load %arg10[%c0_24, %c0_25] : memref<1x512xf32, #tpu.memory_space<vmem>>, vector<1x512xf32>
    tpu.vector_store %arg10[%c0_24, %c0_25], %43 {strides = array<i32>} : memref<1x512xf32, #tpu.memory_space<vmem>>, vector<1x512xf32>,
    return
  }
  func.func @transform_0(%arg0: i32) -> (i32, i32) {
    %c0_i32 = arith.constant 0 : i32
    %c0_i32_0 = arith.constant 0 : i32
    return %c0_i32, %arg0 : i32, i32
  }
  func.func @transform_1(%arg0: i32) -> (i32, i32) {
    %c0_i32 = arith.constant 0 : i32
    %c0_i32_0 = arith.constant 0 : i32
    %c0_i32_1 = arith.constant 0 : i32
    return %c0_i32, %c0_i32_0 : i32, i32
  }
  func.func @transform_2(%arg0: i32) -> (i32, i32) {
    %c0_i32 = arith.constant 0 : i32
    %c0_i32_0 = arith.constant 0 : i32
    %c0_i32_1 = arith.constant 0 : i32
    return %c0_i32, %c0_i32_0 : i32, i32
  }
  func.func @transform_3(%arg0: i32) -> (i32, i32) {
    %c0_i32 = arith.constant 0 : i32
    %c0_i32_0 = arith.constant 0 : i32
    %c0_i32_1 = arith.constant 0 : i32
    return %c0_i32, %c0_i32_0 : i32, i32
  }
  func.func @transform_4(%arg0: i32) -> (i32, i32) {
    %c0_i32 = arith.constant 0 : i32
    %c0_i32_0 = arith.constant 0 : i32
    %c0_i32_1 = arith.constant 0 : i32
    return %c0_i32, %c0_i32_0 : i32, i32
  }
  func.func @transform_5(%arg0: i32) -> (i32, i32) {
    %c0_i32 = arith.constant 0 : i32
    %c0_i32_0 = arith.constant 0 : i32
    %c0_i32_1 = arith.constant 0 : i32
    return %c0_i32, %c0_i32_0 : i32, i32
  }
  func.func @transform_6(%arg0: i32) -> (i32, i32) {
    %c0_i32 = arith.constant 0 : i32
    %c0_i32_0 = arith.constant 0 : i32
    %c0_i32_1 = arith.constant 0 : i32
    return %c0_i32, %c0_i32_0 : i32, i32
  }
  func.func @transform_7(%arg0: i32) -> (i32, i32) {
    %c0_i32 = arith.constant 0 : i32
    %c0_i32_0 = arith.constant 0 : i32
    %c0_i32_1 = arith.constant 0 : i32
    return %c0_i32, %c0_i32_0 : i32, i32
  }
  func.func @transform_8(%arg0: i32) -> (i32, i32) {
    %c0_i32 = arith.constant 0 : i32
    %c0_i32_0 = arith.constant 0 : i32
    %c0_i32_1 = arith.constant 0 : i32
    return %c0_i32, %c0_i32_0 : i32, i32
  }
  func.func @transform_9(%arg0: i32) -> (i32, i32) {
    %c0_i32 = arith.constant 0 : i32
    %c0_i32_0 = arith.constant 0 : i32
    return %c0_i32, %arg0 : i32, i32
  }
}

</mosaic_0001>

<llo_original>
// kernel: tpu_custom_call.1
$region0: #{tpu_custom_call.1}
  #allocation0 [shape = 'u32[]', space=smem, size = 0x4, offset = 0x4, fixed_abs, tag = 'smem constant byte address 0x4 - core index']
  #allocation1 [shape = 'u32[144,128]{1,0:T(1,128)}', space=vmem, size = 0x12000, scoped, tag = 'internal scratch']
  #allocation2 [shape = 'f32[1,1]{1,0:T(1,128)S(1)}', space=vmem, size = 0x200, scoped, tag = 'scoped memory for tpu_custom_call.1']
  %s0 = inlined_call_operand.vmem [shape: f32[2,1024], index: 0, kind: input, shape index: {}]
  %s1 = inlined_call_operand.vmem [shape: f32[64,2], index: 1, kind: input, shape index: {}]
  %s2 = inlined_call_operand.vmem [shape: f32[64,1], index: 2, kind: input, shape index: {}]
  %s3 = inlined_call_operand.vmem [shape: f32[128,64], index: 3, kind: input, shape index: {}]
  %s4 = inlined_call_operand.vmem [shape: f32[128,1], index: 4, kind: input, shape index: {}]
  %s5 = inlined_call_operand.vmem [shape: f32[64,128], index: 5, kind: input, shape index: {}]
  %s6 = inlined_call_operand.vmem [shape: f32[64,1], index: 6, kind: input, shape index: {}]
  %s7 = inlined_call_operand.vmem [shape: f32[64,1], index: 7, kind: input, shape index: {}]
  %s8 = inlined_call_operand.<no memory space> [shape: f32[1,1], index: 8, kind: input, shape index: {}]
  %s9 = inlined_call_operand.hbm [shape: f32[1,1024], index: 9, kind: output, shape index: {}]
  %s10 = sld [smem:[#allocation0]]
  $region69: #{tpu_custom_call.1} parent=0
    _
  %s12 = ssub.s32 1, %s10
  %s13 = scalar_select 0, %s12, %s10
  %v14 = vstv %s8
  %15 = vst [vmem:[#allocation2] sm:$0x1] %v14
  $region1: #{tpu_custom_call.1} parent=0
    #allocation3 [shape = 'u8[4096]{0}', space=vmem, size = 0x1000, scoped, tag = 'output window, operand 0']
    #allocation4 [shape = 's32[2]{0}', space=sflag, size = 0x8, scoped, tag = 'scoped memory for tpu_custom_call.1']
    %16 = vsyncpa [#allocation4], 0
    %s17 = scalar_lea.sflag [#allocation4], 1
    %18 = vsyncpa %s17, 0
    loop: start=0, step=1, limit=4
    $region2: #{tpu_custom_call.1} parent=1 // loop_pre_header
      _
    $region3: #{tpu_custom_call.1} parent=1 // loop_header
      %s20 = sphi 0, %s24
      %p21 = scmp.ge.s32.totalorder %s20, 4
      %s30 = sphi 0, %s32
      %s33 = sphi 0, %s30
      %s34 = sphi 0, %s33
      %s50 = sphi 0, %s34
      %s54 = sphi 0, %s54
      %s56 = sphi 0, %s54
      %s57 = sphi 0, %s56
      %s71 = sphi 0, %s57
      %s75 = sphi 0, %s75
      %s77 = sphi 0, %s75
      %s78 = sphi 0, %s77
      %s92 = sphi 0, %s78
      %s96 = sphi 0, %s96
      %s98 = sphi 0, %s96
      %s99 = sphi 0, %s98
      %s113 = sphi 0, %s99
      %s117 = sphi 0, %s117
      %s119 = sphi 0, %s117
      %s120 = sphi 0, %s119
      %s134 = sphi 0, %s120
      %s138 = sphi 0, %s138
      %s140 = sphi 0, %s138
      %s141 = sphi 0, %s140
      %s155 = sphi 0, %s141
      %s159 = sphi 0, %s159
      %s161 = sphi 0, %s159
      %s162 = sphi 0, %s161
      %s176 = sphi 0, %s162
      %s180 = sphi 0, %s180
      %s182 = sphi 0, %s180
      %s183 = sphi 0, %s182
      %s197 = sphi 0, %s183
      %s201 = sphi 0, %s201
      %s203 = sphi 0, %s201
      %s204 = sphi 0, %s203
      %s218 = sphi 0, %s204
      %s224 = sphi 0, %s226
      %s227 = sphi 0, %s224
      %s228 = sphi 0, %s227
      %s244 = sphi 0, %s228
    $region4: #{tpu_custom_call.1} parent=1 // loop_header_branch
      %23 = sbr.rel (%p21) target = $region8
    $region5: #{tpu_custom_call.1} parent=1 // loop_body
      %s25 = ssub.s32 %s20, 1
      %s26 = ssub.s32 %s20, 2
      %s27 = sadd.s32 %s20, 1
      %s28 = ssub.s32 %s20, %s27
      %p29 = scmp.eq.s32.totalorder %s28, 0
      %s31 = sadd.s32 %s30, 1
      %s32 = scalar_select %p29, %s30, %s31
      %p35 = pneg %p29
      %p36 = scmp.eq.s32.totalorder %s20, 1
      %p37 = por %p35, %p36
      %p38 = scmp.ne.s32.totalorder %s30, %s33
      %p39 = scmp.eq.s32.totalorder %s20, 0
      %p40 = por %p38, %p39
      %p41 = scmp.ne.s32.totalorder %s30, %s33
      %p42 = scmp.eq.s32.totalorder %s25, 1
      %p43 = por %p41, %p42
      %p44 = scmp.ne.s32.totalorder %s33, %s34
      %p45 = scmp.eq.s32.totalorder %s25, 0
      %p46 = por %p44, %p45
      %p47 = scmp.ne.s32.totalorder %s33, %s34
      %p48 = scmp.eq.s32.totalorder %s26, 1
      %p49 = por %p47, %p48
      %p51 = scmp.ne.s32.totalorder %s34, %s50
      %p52 = scmp.eq.s32.totalorder %s26, 0
      %p53 = por %p51, %p52
      %s55 = sadd.s32 %s54, 1
      %p58 = scmp.eq.s32.totalorder %s20, 1
      %p59 = scmp.ne.s32.totalorder %s54, %s56
      %p60 = scmp.eq.s32.totalorder %s20, 0
      %p61 = por %p59, %p60
      %p62 = scmp.ne.s32.totalorder %s54, %s56
      %p63 = scmp.eq.s32.totalorder %s25, 1
      %p64 = por %p62, %p63
      %p65 = scmp.ne.s32.totalorder %s56, %s57
      %p66 = scmp.eq.s32.totalorder %s25, 0
      %p67 = por %p65, %p66
      %p68 = scmp.ne.s32.totalorder %s56, %s57
      %p69 = scmp.eq.s32.totalorder %s26, 1
      %p70 = por %p68, %p69
      %p72 = scmp.ne.s32.totalorder %s57, %s71
      %p73 = scmp.eq.s32.totalorder %s26, 0
      %p74 = por %p72, %p73
      %s76 = sadd.s32 %s75, 1
      %p79 = scmp.eq.s32.totalorder %s20, 1
      %p80 = scmp.ne.s32.totalorder %s75, %s77
      %p81 = scmp.eq.s32.totalorder %s20, 0
      %p82 = por %p80, %p81
      %p83 = scmp.ne.s32.totalorder %s75, %s77
      %p84 = scmp.eq.s32.totalorder %s25, 1
      %p85 = por %p83, %p84
      %p86 = scmp.ne.s32.totalorder %s77, %s78
      %p87 = scmp.eq.s32.totalorder %s25, 0
      %p88 = por %p86, %p87
      %p89 = scmp.ne.s32.totalorder %s77, %s78
      %p90 = scmp.eq.s32.totalorder %s26, 1
      %p91 = por %p89, %p90
      %p93 = scmp.ne.s32.totalorder %s78, %s92
      %p94 = scmp.eq.s32.totalorder %s26, 0
      %p95 = por %p93, %p94
      %s97 = sadd.s32 %s96, 1
      %p100 = scmp.eq.s32.totalorder %s20, 1
      %p101 = scmp.ne.s32.totalorder %s96, %s98
      %p102 = scmp.eq.s32.totalorder %s20, 0
      %p103 = por %p101, %p102
      %p104 = scmp.ne.s32.totalorder %s96, %s98
      %p105 = scmp.eq.s32.totalorder %s25, 1
      %p106 = por %p104, %p105
      %p107 = scmp.ne.s32.totalorder %s98, %s99
      %p108 = scmp.eq.s32.totalorder %s25, 0
      %p109 = por %p107, %p108
      %p110 = scmp.ne.s32.totalorder %s98, %s99
      %p111 = scmp.eq.s32.totalorder %s26, 1
      %p112 = por %p110, %p111
      %p114 = scmp.ne.s32.totalorder %s99, %s113
      %p115 = scmp.eq.s32.totalorder %s26, 0
      %p116 = por %p114, %p115
      %s118 = sadd.s32 %s117, 1
      %p121 = scmp.eq.s32.totalorder %s20, 1
      %p122 = scmp.ne.s32.totalorder %s117, %s119
      %p123 = scmp.eq.s32.totalorder %s20, 0
      %p124 = por %p122, %p123
      %p125 = scmp.ne.s32.totalorder %s117, %s119
      %p126 = scmp.eq.s32.totalorder %s25, 1
      %p127 = por %p125, %p126
      %p128 = scmp.ne.s32.totalorder %s119, %s120
      %p129 = scmp.eq.s32.totalorder %s25, 0
      %p130 = por %p128, %p129
      %p131 = scmp.ne.s32.totalorder %s119, %s120
      %p132 = scmp.eq.s32.totalorder %s26, 1
      %p133 = por %p131, %p132
      %p135 = scmp.ne.s32.totalorder %s120, %s134
      %p136 = scmp.eq.s32.totalorder %s26, 0
      %p137 = por %p135, %p136
      %s139 = sadd.s32 %s138, 1
      %p142 = scmp.eq.s32.totalorder %s20, 1
      %p143 = scmp.ne.s32.totalorder %s138, %s140
      %p144 = scmp.eq.s32.totalorder %s20, 0
      %p145 = por %p143, %p144
      %p146 = scmp.ne.s32.totalorder %s138, %s140
      %p147 = scmp.eq.s32.totalorder %s25, 1
      %p148 = por %p146, %p147
      %p149 = scmp.ne.s32.totalorder %s140, %s141
      %p150 = scmp.eq.s32.totalorder %s25, 0
      %p151 = por %p149, %p150
      %p152 = scmp.ne.s32.totalorder %s140, %s141
      %p153 = scmp.eq.s32.totalorder %s26, 1
      %p154 = por %p152, %p153
      %p156 = scmp.ne.s32.totalorder %s141, %s155
      %p157 = scmp.eq.s32.totalorder %s26, 0
      %p158 = por %p156, %p157
      %s160 = sadd.s32 %s159, 1
      %p163 = scmp.eq.s32.totalorder %s20, 1
      %p164 = scmp.ne.s32.totalorder %s159, %s161
      %p165 = scmp.eq.s32.totalorder %s20, 0
      %p166 = por %p164, %p165
      %p167 = scmp.ne.s32.totalorder %s159, %s161
      %p168 = scmp.eq.s32.totalorder %s25, 1
      %p169 = por %p167, %p168
      %p170 = scmp.ne.s32.totalorder %s161, %s162
      %p171 = scmp.eq.s32.totalorder %s25, 0
      %p172 = por %p170, %p171
      %p173 = scmp.ne.s32.totalorder %s161, %s162
      %p174 = scmp.eq.s32.totalorder %s26, 1
      %p175 = por %p173, %p174
      %p177 = scmp.ne.s32.totalorder %s162, %s176
      %p178 = scmp.eq.s32.totalorder %s26, 0
      %p179 = por %p177, %p178
      %s181 = sadd.s32 %s180, 1
      %p184 = scmp.eq.s32.totalorder %s20, 1
      %p185 = scmp.ne.s32.totalorder %s180, %s182
      %p186 = scmp.eq.s32.totalorder %s20, 0
      %p187 = por %p185, %p186
      %p188 = scmp.ne.s32.totalorder %s180, %s182
      %p189 = scmp.eq.s32.totalorder %s25, 1
      %p190 = por %p188, %p189
      %p191 = scmp.ne.s32.totalorder %s182, %s183
      %p192 = scmp.eq.s32.totalorder %s25, 0
      %p193 = por %p191, %p192
      %p194 = scmp.ne.s32.totalorder %s182, %s183
      %p195 = scmp.eq.s32.totalorder %s26, 1
      %p196 = por %p194, %p195
      %p198 = scmp.ne.s32.totalorder %s183, %s197
      %p199 = scmp.eq.s32.totalorder %s26, 0
      %p200 = por %p198, %p199
      %s202 = sadd.s32 %s201, 1
      %p205 = scmp.eq.s32.totalorder %s20, 1
      %p206 = scmp.ne.s32.totalorder %s201, %s203
      %p207 = scmp.eq.s32.totalorder %s20, 0
      %p208 = por %p206, %p207
      %p209 = scmp.ne.s32.totalorder %s201, %s203
      %p210 = scmp.eq.s32.totalorder %s25, 1
      %p211 = por %p209, %p210
      %p212 = scmp.ne.s32.totalorder %s203, %s204
      %p213 = scmp.eq.s32.totalorder %s25, 0
      %p214 = por %p212, %p213
      %p215 = scmp.ne.s32.totalorder %s203, %s204
      %p216 = scmp.eq.s32.totalorder %s26, 1
      %p217 = por %p215, %p216
      %p219 = scmp.ne.s32.totalorder %s204, %s218
      %p220 = scmp.eq.s32.totalorder %s26, 0
      %p221 = por %p219, %p220
      %s222 = ssub.s32 %s20, %s27
      %p223 = scmp.eq.s32.totalorder %s222, 0
      %s225 = sadd.s32 %s224, 1
      %s226 = scalar_select %p223, %s224, %s225
      %p229 = pneg %p223
      %p230 = scmp.eq.s32.totalorder %s20, 1
      %p231 = por %p229, %p230
      %p232 = scmp.ne.s32.totalorder %s224, %s227
      %p233 = scmp.eq.s32.totalorder %s20, 0
      %p234 = por %p232, %p233
      %p235 = scmp.ne.s32.totalorder %s224, %s227
      %p236 = scmp.eq.s32.totalorder %s25, 1
      %p237 = por %p235, %p236
      %p238 = scmp.ne.s32.totalorder %s227, %s228
      %p239 = scmp.eq.s32.totalorder %s25, 0
      %p240 = por %p238, %p239
      %p241 = scmp.ne.s32.totalorder %s227, %s228
      %p242 = scmp.eq.s32.totalorder %s26, 1
      %p243 = por %p241, %p242
      %p245 = scmp.ne.s32.totalorder %s228, %s244
      %p246 = scmp.eq.s32.totalorder %s26, 0
      %p247 = por %p245, %p246
      %p248 = scmp.le.s32.totalorder 1, %s20
      %p249 = scmp.lt.s32.totalorder %s20, 3
      %p250 = pnand %p248, %p249
      %p251 = pneg %p250
      // Predicated region
      $region9: #{tpu_custom_call.1} parent=5 // pred_check
        _
      $region10: #{tpu_custom_call.1} parent=5 // pred_check_branch
        %253 = sbr.rel (%p250) target = $region12
      $region11: #{tpu_custom_call.1} parent=5 // pred_region
        %s254 = ssub.s32 %s20, 1
        // Predicated region
        $region13: #{tpu_custom_call.1} parent=11 // pred_check
          %p255 = pneg %p67
        $region14: #{tpu_custom_call.1} parent=11 // pred_check_branch
          %257 = sbr.rel (%p255) target = $region16
        $region15: #{tpu_custom_call.1} parent=11 // pred_region
          _
        $region16: #{tpu_custom_call.1} parent=11 // pred_fallthru
          _
        // Predicated region
        $region17: #{tpu_custom_call.1} parent=11 // pred_check
          %p258 = pneg %p88
        $region18: #{tpu_custom_call.1} parent=11 // pred_check_branch
          %260 = sbr.rel (%p258) target = $region20
        $region19: #{tpu_custom_call.1} parent=11 // pred_region
          _
        $region20: #{tpu_custom_call.1} parent=11 // pred_fallthru
          _
        // Predicated region
        $region21: #{tpu_custom_call.1} parent=11 // pred_check
          %p261 = pneg %p109
        $region22: #{tpu_custom_call.1} parent=11 // pred_check_branch
          %263 = sbr.rel (%p261) target = $region24
        $region23: #{tpu_custom_call.1} parent=11 // pred_region
          _
        $region24: #{tpu_custom_call.1} parent=11 // pred_fallthru
          _
        // Predicated region
        $region25: #{tpu_custom_call.1} parent=11 // pred_check
          %p264 = pneg %p130
        $region26: #{tpu_custom_call.1} parent=11 // pred_check_branch
          %266 = sbr.rel (%p264) target = $region28
        $region27: #{tpu_custom_call.1} parent=11 // pred_region
          _
        $region28: #{tpu_custom_call.1} parent=11 // pred_fallthru
          _
        // Predicated region
        $region29: #{tpu_custom_call.1} parent=11 // pred_check
          %p267 = pneg %p151
        $region30: #{tpu_custom_call.1} parent=11 // pred_check_branch
          %269 = sbr.rel (%p267) target = $region32
        $region31: #{tpu_custom_call.1} parent=11 // pred_region
          _
        $region32: #{tpu_custom_call.1} parent=11 // pred_fallthru
          _
        // Predicated region
        $region33: #{tpu_custom_call.1} parent=11 // pred_check
          %p270 = pneg %p172
        $region34: #{tpu_custom_call.1} parent=11 // pred_check_branch
          %272 = sbr.rel (%p270) target = $region36
        $region35: #{tpu_custom_call.1} parent=11 // pred_region
          _
        $region36: #{tpu_custom_call.1} parent=11 // pred_fallthru
          _
        // Predicated region
        $region37: #{tpu_custom_call.1} parent=11 // pred_check
          %p273 = pneg %p193
        $region38: #{tpu_custom_call.1} parent=11 // pred_check_branch
          %275 = sbr.rel (%p273) target = $region40
        $region39: #{tpu_custom_call.1} parent=11 // pred_region
          _
        $region40: #{tpu_custom_call.1} parent=11 // pred_fallthru
          _
        // Predicated region
        $region41: #{tpu_custom_call.1} parent=11 // pred_check
          %p276 = pneg %p214
        $region42: #{tpu_custom_call.1} parent=11 // pred_check_branch
          %278 = sbr.rel (%p276) target = $region44
        $region43: #{tpu_custom_call.1} parent=11 // pred_region
          _
        $region44: #{tpu_custom_call.1} parent=11 // pred_fallthru
          _
      $region12: #{tpu_custom_call.1} parent=5 // pred_fallthru
        _
      %p279 = scmp.lt.s32.totalorder %s20, 2
      // Predicated region
      $region45: #{tpu_custom_call.1} parent=5 // pred_check
        %p280 = pneg %p279
      $region46: #{tpu_custom_call.1} parent=5 // pred_check_branch
        %282 = sbr.rel (%p280) target = $region48
      $region47: #{tpu_custom_call.1} parent=5 // pred_region
        // Predicated region
        $region49: #{tpu_custom_call.1} parent=47 // pred_check
          %p283 = pneg %p40
        $region50: #{tpu_custom_call.1} parent=47 // pred_check_branch
          %285 = sbr.rel (%p283) target = $region52
        $region51: #{tpu_custom_call.1} parent=47 // pred_region
          %s286 = smul.u32 4, %s20
          %p287 = scmp.lt.s32.totalorder %s286, 7
          %s288 = scalar_select %p287, %s286, 7
          %s289 = smul.addr %s288, 2
          %s290 = scalar_lea.vmem %s0, %s289
          %s291 = smul.u32 4, %s20
        $region52: #{tpu_custom_call.1} parent=47 // pred_fallthru
          _
      $region48: #{tpu_custom_call.1} parent=5 // pred_fallthru
        _
      %p292 = scmp.le.s32.totalorder 1, %s20
      %p293 = scmp.lt.s32.totalorder %s20, 3
      %p294 = pnand %p292, %p293
      %p295 = pneg %p294
      // Predicated region
      $region53: #{tpu_custom_call.1} parent=5 // pred_check
        _
      $region54: #{tpu_custom_call.1} parent=5 // pred_check_branch
        %297 = sbr.rel (%p294) target = $region56
      $region55: #{tpu_custom_call.1} parent=5 // pred_region
        %s298 = ssub.s32 %s20, 1
        %s299 = smul.u32 4, %s25
        %p300 = scmp.lt.s32.totalorder %s299, 7
        %s301 = scalar_select %p300, %s299, 7
        %s302 = smul.addr %s301, 2
        %s303 = scalar_lea.vmem %s0, %s302
        %p304 = pneg %p46
        %p305 = pneg %p43
        %p306 = pneg %p67
        %p307 = pneg %p64
        %p308 = pneg %p88
        %p309 = pneg %p85
        %p310 = pneg %p109
        %p311 = pneg %p106
        %p312 = pneg %p130
        %p313 = pneg %p127
        %p314 = pneg %p151
        %p315 = pneg %p148
        %p316 = pneg %p172
        %p317 = pneg %p169
        %p318 = pneg %p193
        %p319 = pneg %p190
        %p320 = pneg %p214
        %p321 = pneg %p211
        %p322 = pneg %p240
        %p323 = pneg %p237
        %s324 = sand.u32 %s227, 1
        %s325 = scalar_lea.sflag [#allocation4], %s324
        %s326 = sand.u32 %s227, 1
        %s327 = smul.addr %s326, 4
        %s328 = scalar_lea.vmem [#allocation3], %s327
        %s329 = smul.u32 4, %s25
        %p330 = scmp.lt.s32.totalorder %s329, 7
        %s331 = scalar_select %p330, %s329, 7
        %s332 = smul.addr %s331, 2
        %s333 = scalar_lea.vmem %s0, %s332
        %s334 = smul.u32 4, %s25
        %s335 = smul.u32 4, %s25
        %v336 = vld [vmem:[%s333] sm:$0xff]
        %v337 = vld [vmem:[%s1] sm:$0xff]
        %v338 = vld [vmem:[%s1 + $0x8] sm:$0xff]
        %v339 = vld [vmem:[%s1 + $0x10] sm:$0xff]
        %v340 = vld [vmem:[%s1 + $0x18] sm:$0xff]
        %v341 = vld [vmem:[%s1 + $0x20] sm:$0xff]
        %v342 = vld [vmem:[%s1 + $0x28] sm:$0xff]
        %v343 = vld [vmem:[%s1 + $0x30] sm:$0xff]
        %v344 = vld [vmem:[%s1 + $0x38] sm:$0xff]
        %346 = vset.pattern.permute.xlu0 0
        %347 = vperm.xlu0 %346, %v337
        %v348 = vpop.permute.xlu0 %347
        %351 = vset.pattern.permute.xlu0 0
        %352 = vperm.xlu0 %351, %v338
        %v353 = vpop.permute.xlu0 %352
        %356 = vset.pattern.permute.xlu0 0
        %357 = vperm.xlu0 %356, %v339
        %v358 = vpop.permute.xlu0 %357
        %361 = vset.pattern.permute.xlu0 0
        %362 = vperm.xlu0 %361, %v340
        %v363 = vpop.permute.xlu0 %362
        %366 = vset.pattern.permute.xlu0 0
        %367 = vperm.xlu0 %366, %v341
        %v368 = vpop.permute.xlu0 %367
        %371 = vset.pattern.permute.xlu0 0
        %372 = vperm.xlu0 %371, %v342
        %v373 = vpop.permute.xlu0 %372
        %376 = vset.pattern.permute.xlu0 0
        %377 = vperm.xlu0 %376, %v343
        %v378 = vpop.permute.xlu0 %377
        %381 = vset.pattern.permute.xlu0 0
        %382 = vperm.xlu0 %381, %v344
        %v383 = vpop.permute.xlu0 %382
        %v386 = vlaneseq
        %v387 = vshrl.u32 %v386, 7
        %v388 = vsub.s32 0, %v387
        %v389 = vrot.slane %v336, %v388
        %v390 = vlaneseq
        %v391 = vshrl.u32 %v390, 7
        %v392 = vsub.s32 2, %v391
        %v393 = vrot.slane %v336, %v392
        %v394 = vlaneseq
        %v395 = vshrl.u32 %v394, 7
        %v396 = vsub.s32 4, %v395
        %v397 = vrot.slane %v336, %v396
        %v398 = vlaneseq
        %v399 = vshrl.u32 %v398, 7
        %v400 = vsub.s32 6, %v399
        %v401 = vrot.slane %v336, %v400
        %v406 = vlaneseq
        %v407 = vshrl.u32 %v406, 7
        %v408 = vsub.s32 0, %v407
        %v409 = vrot.slane %v389, %v408
        %v410 = vlaneseq
        %v411 = vshrl.u32 %v410, 7
        %v412 = vsub.s32 0, %v411
        %v413 = vrot.slane %v393, %v412
        %v414 = vlaneseq
        %v415 = vshrl.u32 %v414, 7
        %v416 = vsub.s32 0, %v415
        %v417 = vrot.slane %v397, %v416
        %v418 = vlaneseq
        %v419 = vshrl.u32 %v418, 7
        %v420 = vsub.s32 0, %v419
        %v421 = vrot.slane %v401, %v420
        %v422 = vmul.f32 %v348, %v409
        %v423 = vmul.f32 %v348, %v413
        %v424 = vmul.f32 %v348, %v417
        %v425 = vmul.f32 %v348, %v421
        %v426 = vmul.f32 %v353, %v409
        %v427 = vmul.f32 %v353, %v413
        %v428 = vmul.f32 %v353, %v417
        %v429 = vmul.f32 %v353, %v421
        %v430 = vmul.f32 %v358, %v409
        %v431 = vmul.f32 %v358, %v413
        %v432 = vmul.f32 %v358, %v417
        %v433 = vmul.f32 %v358, %v421
        %v434 = vmul.f32 %v363, %v409
        %v435 = vmul.f32 %v363, %v413
        %v436 = vmul.f32 %v363, %v417
        %v437 = vmul.f32 %v363, %v421
        %v438 = vmul.f32 %v368, %v409
        %v439 = vmul.f32 %v368, %v413
        %v440 = vmul.f32 %v368, %v417
        %v441 = vmul.f32 %v368, %v421
        %v442 = vmul.f32 %v373, %v409
        %v443 = vmul.f32 %v373, %v413
        %v444 = vmul.f32 %v373, %v417
        %v445 = vmul.f32 %v373, %v421
        %v446 = vmul.f32 %v378, %v409
        %v447 = vmul.f32 %v378, %v413
        %v448 = vmul.f32 %v378, %v417
        %v449 = vmul.f32 %v378, %v421
        %v450 = vmul.f32 %v383, %v409
        %v451 = vmul.f32 %v383, %v413
        %v452 = vmul.f32 %v383, %v417
        %v453 = vmul.f32 %v383, %v421
        %454 = vset.pattern.permute.xlu0 1
        %455 = vperm.xlu0 %454, %v337
        %v456 = vpop.permute.xlu0 %455
        %458 = vset.pattern.permute.xlu0 1
        %459 = vperm.xlu0 %458, %v338
        %v460 = vpop.permute.xlu0 %459
        %462 = vset.pattern.permute.xlu0 1
        %463 = vperm.xlu0 %462, %v339
        %v464 = vpop.permute.xlu0 %463
        %466 = vset.pattern.permute.xlu0 1
        %467 = vperm.xlu0 %466, %v340
        %v468 = vpop.permute.xlu0 %467
        %470 = vset.pattern.permute.xlu0 1
        %471 = vperm.xlu0 %470, %v341
        %v472 = vpop.permute.xlu0 %471
        %474 = vset.pattern.permute.xlu0 1
        %475 = vperm.xlu0 %474, %v342
        %v476 = vpop.permute.xlu0 %475
        %478 = vset.pattern.permute.xlu0 1
        %479 = vperm.xlu0 %478, %v343
        %v480 = vpop.permute.xlu0 %479
        %482 = vset.pattern.permute.xlu0 1
        %483 = vperm.xlu0 %482, %v344
        %v484 = vpop.permute.xlu0 %483
        %v486 = vlaneseq
        %v487 = vshrl.u32 %v486, 7
        %v488 = vsub.s32 1, %v487
        %v489 = vrot.slane %v336, %v488
        %v490 = vlaneseq
        %v491 = vshrl.u32 %v490, 7
        %v492 = vsub.s32 3, %v491
        %v493 = vrot.slane %v336, %v492
        %v494 = vlaneseq
        %v495 = vshrl.u32 %v494, 7
        %v496 = vsub.s32 5, %v495
        %v497 = vrot.slane %v336, %v496
        %v498 = vlaneseq
        %v499 = vshrl.u32 %v498, 7
        %v500 = vsub.s32 7, %v499
        %v501 = vrot.slane %v336, %v500
        %v506 = vlaneseq
        %v507 = vshrl.u32 %v506, 7
        %v508 = vsub.s32 1, %v507
        %v509 = vrot.slane %v489, %v508
        %v510 = vlaneseq
        %v511 = vshrl.u32 %v510, 7
        %v512 = vsub.s32 1, %v511
        %v513 = vrot.slane %v493, %v512
        %v514 = vlaneseq
        %v515 = vshrl.u32 %v514, 7
        %v516 = vsub.s32 1, %v515
        %v517 = vrot.slane %v497, %v516
        %v518 = vlaneseq
        %v519 = vshrl.u32 %v518, 7
        %v520 = vsub.s32 1, %v519
        %v521 = vrot.slane %v501, %v520
        %v522 = vmul.f32 %v456, %v509
        %v523 = vmul.f32 %v456, %v513
        %v524 = vmul.f32 %v456, %v517
        %v525 = vmul.f32 %v456, %v521
        %v526 = vmul.f32 %v460, %v509
        %v527 = vmul.f32 %v460, %v513
        %v528 = vmul.f32 %v460, %v517
        %v529 = vmul.f32 %v460, %v521
        %v530 = vmul.f32 %v464, %v509
        %v531 = vmul.f32 %v464, %v513
        %v532 = vmul.f32 %v464, %v517
        %v533 = vmul.f32 %v464, %v521
        %v534 = vmul.f32 %v468, %v509
        %v535 = vmul.f32 %v468, %v513
        %v536 = vmul.f32 %v468, %v517
        %v537 = vmul.f32 %v468, %v521
        %v538 = vmul.f32 %v472, %v509
        %v539 = vmul.f32 %v472, %v513
        %v540 = vmul.f32 %v472, %v517
        %v541 = vmul.f32 %v472, %v521
        %v542 = vmul.f32 %v476, %v509
        %v543 = vmul.f32 %v476, %v513
        %v544 = vmul.f32 %v476, %v517
        %v545 = vmul.f32 %v476, %v521
        %v546 = vmul.f32 %v480, %v509
        %v547 = vmul.f32 %v480, %v513
        %v548 = vmul.f32 %v480, %v517
        %v549 = vmul.f32 %v480, %v521
        %v550 = vmul.f32 %v484, %v509
        %v551 = vmul.f32 %v484, %v513
        %v552 = vmul.f32 %v484, %v517
        %v553 = vmul.f32 %v484, %v521
        %v554 = vadd.f32 %v422, %v522
        %v555 = vadd.f32 %v423, %v523
        %v556 = vadd.f32 %v424, %v524
        %v557 = vadd.f32 %v425, %v525
        %v558 = vadd.f32 %v426, %v526
        %v559 = vadd.f32 %v427, %v527
        %v560 = vadd.f32 %v428, %v528
        %v561 = vadd.f32 %v429, %v529
        %v562 = vadd.f32 %v430, %v530
        %v563 = vadd.f32 %v431, %v531
        %v564 = vadd.f32 %v432, %v532
        %v565 = vadd.f32 %v433, %v533
        %v566 = vadd.f32 %v434, %v534
        %v567 = vadd.f32 %v435, %v535
        %v568 = vadd.f32 %v436, %v536
        %v569 = vadd.f32 %v437, %v537
        %v570 = vadd.f32 %v438, %v538
        %v571 = vadd.f32 %v439, %v539
        %v572 = vadd.f32 %v440, %v540
        %v573 = vadd.f32 %v441, %v541
        %v574 = vadd.f32 %v442, %v542
        %v575 = vadd.f32 %v443, %v543
        %v576 = vadd.f32 %v444, %v544
        %v577 = vadd.f32 %v445, %v545
        %v578 = vadd.f32 %v446, %v546
        %v579 = vadd.f32 %v447, %v547
        %v580 = vadd.f32 %v448, %v548
        %v581 = vadd.f32 %v449, %v549
        %v582 = vadd.f32 %v450, %v550
        %v583 = vadd.f32 %v451, %v551
        %v584 = vadd.f32 %v452, %v552
        %v585 = vadd.f32 %v453, %v553
        %v586 = vld [vmem:[%s2] sm:$0xff]
        %v587 = vld [vmem:[%s2 + $0x8] sm:$0xff]
        %v588 = vld [vmem:[%s2 + $0x10] sm:$0xff]
        %v589 = vld [vmem:[%s2 + $0x18] sm:$0xff]
        %v590 = vld [vmem:[%s2 + $0x20] sm:$0xff]
        %v591 = vld [vmem:[%s2 + $0x28] sm:$0xff]
        %v592 = vld [vmem:[%s2 + $0x30] sm:$0xff]
        %v593 = vld [vmem:[%s2 + $0x38] sm:$0xff]
        %595 = vset.pattern.permute.xlu0 0
        %596 = vperm.xlu0 %595, %v586
        %v597 = vpop.permute.xlu0 %596
        %600 = vset.pattern.permute.xlu0 0
        %601 = vperm.xlu0 %600, %v587
        %v602 = vpop.permute.xlu0 %601
        %605 = vset.pattern.permute.xlu0 0
        %606 = vperm.xlu0 %605, %v588
        %v607 = vpop.permute.xlu0 %606
        %610 = vset.pattern.permute.xlu0 0
        %611 = vperm.xlu0 %610, %v589
        %v612 = vpop.permute.xlu0 %611
        %615 = vset.pattern.permute.xlu0 0
        %616 = vperm.xlu0 %615, %v590
        %v617 = vpop.permute.xlu0 %616
        %620 = vset.pattern.permute.xlu0 0
        %621 = vperm.xlu0 %620, %v591
        %v622 = vpop.permute.xlu0 %621
        %625 = vset.pattern.permute.xlu0 0
        %626 = vperm.xlu0 %625, %v592
        %v627 = vpop.permute.xlu0 %626
        %630 = vset.pattern.permute.xlu0 0
        %631 = vperm.xlu0 %630, %v593
        %v632 = vpop.permute.xlu0 %631
        %v634 = vadd.f32 %v554, %v597
        %v635 = vadd.f32 %v555, %v597
        %v636 = vadd.f32 %v556, %v597
        %v637 = vadd.f32 %v557, %v597
        %v638 = vadd.f32 %v558, %v602
        %v639 = vadd.f32 %v559, %v602
        %v640 = vadd.f32 %v560, %v602
        %v641 = vadd.f32 %v561, %v602
        %v642 = vadd.f32 %v562, %v607
        %v643 = vadd.f32 %v563, %v607
        %v644 = vadd.f32 %v564, %v607
        %v645 = vadd.f32 %v565, %v607
        %v646 = vadd.f32 %v566, %v612
        %v647 = vadd.f32 %v567, %v612
        %v648 = vadd.f32 %v568, %v612
        %v649 = vadd.f32 %v569, %v612
        %v650 = vadd.f32 %v570, %v617
        %v651 = vadd.f32 %v571, %v617
        %v652 = vadd.f32 %v572, %v617
        %v653 = vadd.f32 %v573, %v617
        %v654 = vadd.f32 %v574, %v622
        %v655 = vadd.f32 %v575, %v622
        %v656 = vadd.f32 %v576, %v622
        %v657 = vadd.f32 %v577, %v622
        %v658 = vadd.f32 %v578, %v627
        %v659 = vadd.f32 %v579, %v627
        %v660 = vadd.f32 %v580, %v627
        %v661 = vadd.f32 %v581, %v627
        %v662 = vadd.f32 %v582, %v632
        %v663 = vadd.f32 %v583, %v632
        %v664 = vadd.f32 %v584, %v632
        %v665 = vadd.f32 %v585, %v632
        %v666 = vmax.f32 %v634, 0.0
        %v667 = vmax.f32 %v635, 0.0
        %v668 = vmax.f32 %v636, 0.0
        %v669 = vmax.f32 %v637, 0.0
        %v670 = vmax.f32 %v638, 0.0
        %v671 = vmax.f32 %v639, 0.0
        %v672 = vmax.f32 %v640, 0.0
        %v673 = vmax.f32 %v641, 0.0
        %v674 = vmax.f32 %v642, 0.0
        %v675 = vmax.f32 %v643, 0.0
        %v676 = vmax.f32 %v644, 0.0
        %v677 = vmax.f32 %v645, 0.0
        %v678 = vmax.f32 %v646, 0.0
        %v679 = vmax.f32 %v647, 0.0
        %v680 = vmax.f32 %v648, 0.0
        %v681 = vmax.f32 %v649, 0.0
        %v682 = vmax.f32 %v650, 0.0
        %v683 = vmax.f32 %v651, 0.0
        %v684 = vmax.f32 %v652, 0.0
        %v685 = vmax.f32 %v653, 0.0
        %v686 = vmax.f32 %v654, 0.0
        %v687 = vmax.f32 %v655, 0.0
        %v688 = vmax.f32 %v656, 0.0
        %v689 = vmax.f32 %v657, 0.0
        %v690 = vmax.f32 %v658, 0.0
        %v691 = vmax.f32 %v659, 0.0
        %v692 = vmax.f32 %v660, 0.0
        %v693 = vmax.f32 %v661, 0.0
        %v694 = vmax.f32 %v662, 0.0
        %v695 = vmax.f32 %v663, 0.0
        %v696 = vmax.f32 %v664, 0.0
        %v697 = vmax.f32 %v665, 0.0
        %v698 = vld [vmem:[%s3] sm:$0xff]
        %v699 = vld [vmem:[%s3 + $0x8] sm:$0xff]
        %v700 = vld [vmem:[%s3 + $0x10] sm:$0xff]
        %v701 = vld [vmem:[%s3 + $0x18] sm:$0xff]
        %v702 = vld [vmem:[%s3 + $0x20] sm:$0xff]
        %v703 = vld [vmem:[%s3 + $0x28] sm:$0xff]
        %v704 = vld [vmem:[%s3 + $0x30] sm:$0xff]
        %v705 = vld [vmem:[%s3 + $0x38] sm:$0xff]
        %v706 = vld [vmem:[%s3 + $0x40] sm:$0xff]
        %v707 = vld [vmem:[%s3 + $0x48] sm:$0xff]
        %v708 = vld [vmem:[%s3 + $0x50] sm:$0xff]
        %v709 = vld [vmem:[%s3 + $0x58] sm:$0xff]
        %v710 = vld [vmem:[%s3 + $0x60] sm:$0xff]
        %v711 = vld [vmem:[%s3 + $0x68] sm:$0xff]
        %v712 = vld [vmem:[%s3 + $0x70] sm:$0xff]
        %v713 = vld [vmem:[%s3 + $0x78] sm:$0xff]
        %v714 = vld [vmem:[%s4] sm:$0xff]
        %v715 = vld [vmem:[%s4 + $0x8] sm:$0xff]
        %v716 = vld [vmem:[%s4 + $0x10] sm:$0xff]
        %v717 = vld [vmem:[%s4 + $0x18] sm:$0xff]
        %v718 = vld [vmem:[%s4 + $0x20] sm:$0xff]
        %v719 = vld [vmem:[%s4 + $0x28] sm:$0xff]
        %v720 = vld [vmem:[%s4 + $0x30] sm:$0xff]
        %v721 = vld [vmem:[%s4 + $0x38] sm:$0xff]
        %v722 = vld [vmem:[%s4 + $0x40] sm:$0xff]
        %v723 = vld [vmem:[%s4 + $0x48] sm:$0xff]
        %v724 = vld [vmem:[%s4 + $0x50] sm:$0xff]
        %v725 = vld [vmem:[%s4 + $0x58] sm:$0xff]
        %v726 = vld [vmem:[%s4 + $0x60] sm:$0xff]
        %v727 = vld [vmem:[%s4 + $0x68] sm:$0xff]
        %v728 = vld [vmem:[%s4 + $0x70] sm:$0xff]
        %v729 = vld [vmem:[%s4 + $0x78] sm:$0xff]
        %731 = vset.pattern.permute.xlu0 0
        %732 = vperm.xlu0 %731, %v714
        %v733 = vpop.permute.xlu0 %732
        %736 = vset.pattern.permute.xlu0 0
        %737 = vperm.xlu0 %736, %v715
        %v738 = vpop.permute.xlu0 %737
        %741 = vset.pattern.permute.xlu0 0
        %742 = vperm.xlu0 %741, %v716
        %v743 = vpop.permute.xlu0 %742
        %746 = vset.pattern.permute.xlu0 0
        %747 = vperm.xlu0 %746, %v717
        %v748 = vpop.permute.xlu0 %747
        %751 = vset.pattern.permute.xlu0 0
        %752 = vperm.xlu0 %751, %v718
        %v753 = vpop.permute.xlu0 %752
        %756 = vset.pattern.permute.xlu0 0
        %757 = vperm.xlu0 %756, %v719
        %v758 = vpop.permute.xlu0 %757
        %761 = vset.pattern.permute.xlu0 0
        %762 = vperm.xlu0 %761, %v720
        %v763 = vpop.permute.xlu0 %762
        %766 = vset.pattern.permute.xlu0 0
        %767 = vperm.xlu0 %766, %v721
        %v768 = vpop.permute.xlu0 %767
        %771 = vset.pattern.permute.xlu0 0
        %772 = vperm.xlu0 %771, %v722
        %v773 = vpop.permute.xlu0 %772
        %776 = vset.pattern.permute.xlu0 0
        %777 = vperm.xlu0 %776, %v723
        %v778 = vpop.permute.xlu0 %777
        %781 = vset.pattern.permute.xlu0 0
        %782 = vperm.xlu0 %781, %v724
        %v783 = vpop.permute.xlu0 %782
        %786 = vset.pattern.permute.xlu0 0
        %787 = vperm.xlu0 %786, %v725
        %v788 = vpop.permute.xlu0 %787
        %791 = vset.pattern.permute.xlu0 0
        %792 = vperm.xlu0 %791, %v726
        %v793 = vpop.permute.xlu0 %792
        %796 = vset.pattern.permute.xlu0 0
        %797 = vperm.xlu0 %796, %v727
        %v798 = vpop.permute.xlu0 %797
        %801 = vset.pattern.permute.xlu0 0
        %802 = vperm.xlu0 %801, %v728
        %v803 = vpop.permute.xlu0 %802
        %806 = vset.pattern.permute.xlu0 0
        %807 = vperm.xlu0 %806, %v729
        %v808 = vpop.permute.xlu0 %807
        %vm810 = vcmask 523264
        %v812 = vsel %vm810, %v698, 0
        %v815 = vsel %vm810, %v699, 0
        %v818 = vsel %vm810, %v700, 0
        %v821 = vsel %vm810, %v701, 0
        %v824 = vsel %vm810, %v702, 0
        %v827 = vsel %vm810, %v703, 0
        %v830 = vsel %vm810, %v704, 0
        %v833 = vsel %vm810, %v705, 0
        %v836 = vsel %vm810, %v706, 0
        %v839 = vsel %vm810, %v707, 0
        %v842 = vsel %vm810, %v708, 0
        %v845 = vsel %vm810, %v709, 0
        %v848 = vsel %vm810, %v710, 0
        %v851 = vsel %vm810, %v711, 0
        %v854 = vsel %vm810, %v712, 0
        %v857 = vsel %vm810, %v713, 0
        %859 = vmatprep.subr.mxu0 %v667
        %860 = vmatpush1.msra.mxu0 %v666
        %861 = vmatprep.subr.mxu0 %v671
        %862 = vmatpush1.msra.mxu0 %v670
        %863 = vmatprep.subr.mxu0 %v675
        %864 = vmatpush1.msra.mxu0 %v674
        %865 = vmatprep.subr.mxu0 %v679
        %866 = vmatpush1.msra.mxu0 %v678
        %867 = vmatprep.subr.mxu0 %v683
        %868 = vmatpush1.msra.mxu0 %v682
        %869 = vmatprep.subr.mxu0 %v687
        %870 = vmatpush1.msra.mxu0 %v686
        %871 = vmatprep.subr.mxu0 %v691
        %872 = vmatpush1.msra.mxu0 %v690
        %873 = vmatprep.subr.mxu0 %v695
        %874 = vmatpush1.msra.mxu0 %v694
        %875 = vmatprep.subr.mxu0 0.0
        %876 = vmatpush1.msra.mxu0 0.0
        %877 = vmatprep.subr.mxu0 0.0
        %878 = vmatpush1.msra.mxu0 0.0
        %879 = vmatprep.subr.mxu0 0.0
        %880 = vmatpush1.msra.mxu0 0.0
        %881 = vmatprep.subr.mxu0 0.0
        %882 = vmatpush1.msra.mxu0 0.0
        %883 = vmatprep.subr.mxu0 0.0
        %884 = vmatpush1.msra.mxu0 0.0
        %885 = vmatprep.subr.mxu0 0.0
        %886 = vmatpush1.msra.mxu0 0.0
        %887 = vmatprep.subr.mxu0 0.0
        %888 = vmatpush1.msra.mxu0 0.0
        %889 = vmatprep.subr.mxu0 0.0
        %890 = vmatpush1.msra.mxu0 0.0
        %891 = vmatprep.subr.mxu0 0.0
        %892 = vmatpush1.msra.mxu0 0.0
        %893 = vmatprep.subr.mxu0 0.0
        %894 = vmatpush1.msra.mxu0 0.0
        %895 = vmatprep.subr.mxu0 0.0
        %896 = vmatpush1.msra.mxu0 0.0
        %897 = vmatprep.subr.mxu0 0.0
        %898 = vmatpush1.msra.mxu0 0.0
        %899 = vmatprep.subr.mxu0 0.0
        %900 = vmatpush1.msra.mxu0 0.0
        %901 = vmatprep.subr.mxu0 0.0
        %902 = vmatpush1.msra.mxu0 0.0
        %903 = vmatprep.subr.mxu0 0.0
        %904 = vmatpush1.msra.mxu0 0.0
        %905 = vmatprep.subr.mxu0 0.0
        %906 = vmatpush1.msra.mxu0 0.0
        %907 = vmatprep.subr.mxu0 0.0
        %908 = vmatpush1.msra.mxu0 0.0
        %909 = vmatprep.subr.mxu0 0.0
        %910 = vmatpush1.msra.mxu0 0.0
        %911 = vmatprep.subr.mxu0 0.0
        %912 = vmatpush1.msra.mxu0 0.0
        %913 = vmatprep.subr.mxu0 0.0
        %914 = vmatpush1.msra.mxu0 0.0
        %915 = vmatprep.subr.mxu0 0.0
        %916 = vmatpush1.msra.mxu0 0.0
        %917 = vmatprep.subr.mxu0 0.0
        %918 = vmatpush1.msra.mxu0 0.0
        %919 = vmatprep.subr.mxu0 0.0
        %920 = vmatpush1.msra.mxu0 0.0
        %921 = vmatprep.subr.mxu0 0.0
        %922 = vmatpush1.msra.mxu0 0.0
        %923 = vmatprep.mubr.f32.mxu0 0.0
        %924 = vmatmul.mubr.f32.gmra.mrb[0].mxu0 %v812
        %v925 = vpop.f32.mrb[0].mxu0
        %v926 = vadd.f32 %v733, %v925
        %v927 = vpop.f32.mrb[0].mxu0
        %v928 = vadd.f32 %v733, %v927
        %929 = vmatprep.mubr.f32.mxu0 0.0
        %930 = vmatmul.mubr.f32.gmra.mrb[0].mxu0 %v815
        %v931 = vpop.f32.mrb[0].mxu0
        %v932 = vadd.f32 %v738, %v931
        %v933 = vpop.f32.mrb[0].mxu0
        %v934 = vadd.f32 %v738, %v933
        %935 = vmatprep.mubr.f32.mxu0 0.0
        %936 = vmatmul.mubr.f32.gmra.mrb[0].mxu0 %v818
        %v937 = vpop.f32.mrb[0].mxu0
        %v938 = vadd.f32 %v743, %v937
        %v939 = vpop.f32.mrb[0].mxu0
        %v940 = vadd.f32 %v743, %v939
        %941 = vmatprep.mubr.f32.mxu0 0.0
        %942 = vmatmul.mubr.f32.gmra.mrb[0].mxu0 %v821
        %v943 = vpop.f32.mrb[0].mxu0
        %v944 = vadd.f32 %v748, %v943
        %v945 = vpop.f32.mrb[0].mxu0
        %v946 = vadd.f32 %v748, %v945
        %947 = vmatprep.mubr.f32.mxu0 0.0
        %948 = vmatmul.mubr.f32.gmra.mrb[0].mxu0 %v824
        %v949 = vpop.f32.mrb[0].mxu0
        %v950 = vadd.f32 %v753, %v949
        %v951 = vpop.f32.mrb[0].mxu0
        %v952 = vadd.f32 %v753, %v951
        %953 = vmatprep.mubr.f32.mxu0 0.0
        %954 = vmatmul.mubr.f32.gmra.mrb[0].mxu0 %v827
        %v955 = vpop.f32.mrb[0].mxu0
        %v956 = vadd.f32 %v758, %v955
        %v957 = vpop.f32.mrb[0].mxu0
        %v958 = vadd.f32 %v758, %v957
        %959 = vmatprep.mubr.f32.mxu0 0.0
        %960 = vmatmul.mubr.f32.gmra.mrb[0].mxu0 %v830
        %v961 = vpop.f32.mrb[0].mxu0
        %v962 = vadd.f32 %v763, %v961
        %v963 = vpop.f32.mrb[0].mxu0
        %v964 = vadd.f32 %v763, %v963
        %965 = vmatprep.mubr.f32.mxu0 0.0
        %966 = vmatmul.mubr.f32.gmra.mrb[0].mxu0 %v833
        %v967 = vpop.f32.mrb[0].mxu0
        %v968 = vadd.f32 %v768, %v967
        %v969 = vpop.f32.mrb[0].mxu0
        %v970 = vadd.f32 %v768, %v969
        %971 = vmatprep.mubr.f32.mxu0 0.0
        %972 = vmatmul.mubr.f32.gmra.mrb[0].mxu0 %v836
        %v973 = vpop.f32.mrb[0].mxu0
        %v974 = vadd.f32 %v773, %v973
        %v975 = vpop.f32.mrb[0].mxu0
        %v976 = vadd.f32 %v773, %v975
        %977 = vmatprep.mubr.f32.mxu0 0.0
        %978 = vmatmul.mubr.f32.gmra.mrb[0].mxu0 %v839
        %v979 = vpop.f32.mrb[0].mxu0
        %v980 = vadd.f32 %v778, %v979
        %v981 = vpop.f32.mrb[0].mxu0
        %v982 = vadd.f32 %v778, %v981
        %983 = vmatprep.mubr.f32.mxu0 0.0
        %984 = vmatmul.mubr.f32.gmra.mrb[0].mxu0 %v842
        %v985 = vpop.f32.mrb[0].mxu0
        %v986 = vadd.f32 %v783, %v985
        %v987 = vpop.f32.mrb[0].mxu0
        %v988 = vadd.f32 %v783, %v987
        %989 = vmatprep.mubr.f32.mxu0 0.0
        %990 = vmatmul.mubr.f32.gmra.mrb[0].mxu0 %v845
        %v991 = vpop.f32.mrb[0].mxu0
        %v992 = vadd.f32 %v788, %v991
        %v993 = vpop.f32.mrb[0].mxu0
        %v994 = vadd.f32 %v788, %v993
        %995 = vmatprep.mubr.f32.mxu0 0.0
        %996 = vmatmul.mubr.f32.gmra.mrb[0].mxu0 %v848
        %v997 = vpop.f32.mrb[0].mxu0
        %v998 = vadd.f32 %v793, %v997
        %v999 = vpop.f32.mrb[0].mxu0
        %v1000 = vadd.f32 %v793, %v999
        %1001 = vmatprep.mubr.f32.mxu0 0.0
        %1002 = vmatmul.mubr.f32.gmra.mrb[0].mxu0 %v851
        %v1003 = vpop.f32.mrb[0].mxu0
        %v1004 = vadd.f32 %v798, %v1003
        %v1005 = vpop.f32.mrb[0].mxu0
        %v1006 = vadd.f32 %v798, %v1005
        %1007 = vmatprep.mubr.f32.mxu0 0.0
        %1008 = vmatmul.mubr.f32.gmra.mrb[0].mxu0 %v854
        %v1009 = vpop.f32.mrb[0].mxu0
        %v1010 = vadd.f32 %v803, %v1009
        %v1011 = vpop.f32.mrb[0].mxu0
        %v1012 = vadd.f32 %v803, %v1011
        %1013 = vmatprep.mubr.f32.mxu0 0.0
        %1014 = vmatmul.mubr.f32.gmra.mrb[0].mxu0 %v857
        %v1015 = vpop.f32.mrb[0].mxu0
        %v1016 = vadd.f32 %v808, %v1015
        %v1017 = vpop.f32.mrb[0].mxu0
        %v1018 = vadd.f32 %v808, %v1017
        %1019 = vdwg.mxu0
        %1020 = vmatprep.subr.mxu0 %v669
        %1021 = vmatpush1.msra.mxu0 %v668
        %1022 = vmatprep.subr.mxu0 %v673
        %1023 = vmatpush1.msra.mxu0 %v672
        %1024 = vmatprep.subr.mxu0 %v677
        %1025 = vmatpush1.msra.mxu0 %v676
        %1026 = vmatprep.subr.mxu0 %v681
        %1027 = vmatpush1.msra.mxu0 %v680
        %1028 = vmatprep.subr.mxu0 %v685
        %1029 = vmatpush1.msra.mxu0 %v684
        %1030 = vmatprep.subr.mxu0 %v689
        %1031 = vmatpush1.msra.mxu0 %v688
        %1032 = vmatprep.subr.mxu0 %v693
        %1033 = vmatpush1.msra.mxu0 %v692
        %1034 = vmatprep.subr.mxu0 %v697
        %1035 = vmatpush1.msra.mxu0 %v696
        %1036 = vmatprep.subr.mxu0 0.0
        %1037 = vmatpush1.msra.mxu0 0.0
        %1038 = vmatprep.subr.mxu0 0.0
        %1039 = vmatpush1.msra.mxu0 0.0
        %1040 = vmatprep.subr.mxu0 0.0
        %1041 = vmatpush1.msra.mxu0 0.0
        %1042 = vmatprep.subr.mxu0 0.0
        %1043 = vmatpush1.msra.mxu0 0.0
        %1044 = vmatprep.subr.mxu0 0.0
        %1045 = vmatpush1.msra.mxu0 0.0
        %1046 = vmatprep.subr.mxu0 0.0
        %1047 = vmatpush1.msra.mxu0 0.0
        %1048 = vmatprep.subr.mxu0 0.0
        %1049 = vmatpush1.msra.mxu0 0.0
        %1050 = vmatprep.subr.mxu0 0.0
        %1051 = vmatpush1.msra.mxu0 0.0
        %1052 = vmatprep.subr.mxu0 0.0
        %1053 = vmatpush1.msra.mxu0 0.0
        %1054 = vmatprep.subr.mxu0 0.0
        %1055 = vmatpush1.msra.mxu0 0.0
        %1056 = vmatprep.subr.mxu0 0.0
        %1057 = vmatpush1.msra.mxu0 0.0
        %1058 = vmatprep.subr.mxu0 0.0
        %1059 = vmatpush1.msra.mxu0 0.0
        %1060 = vmatprep.subr.mxu0 0.0
        %1061 = vmatpush1.msra.mxu0 0.0
        %1062 = vmatprep.subr.mxu0 0.0
        %1063 = vmatpush1.msra.mxu0 0.0
        %1064 = vmatprep.subr.mxu0 0.0
        %1065 = vmatpush1.msra.mxu0 0.0
        %1066 = vmatprep.subr.mxu0 0.0
        %1067 = vmatpush1.msra.mxu0 0.0
        %1068 = vmatprep.subr.mxu0 0.0
        %1069 = vmatpush1.msra.mxu0 0.0
        %1070 = vmatprep.subr.mxu0 0.0
        %1071 = vmatpush1.msra.mxu0 0.0
        %1072 = vmatprep.subr.mxu0 0.0
        %1073 = vmatpush1.msra.mxu0 0.0
        %1074 = vmatprep.subr.mxu0 0.0
        %1075 = vmatpush1.msra.mxu0 0.0
        %1076 = vmatprep.subr.mxu0 0.0
        %1077 = vmatpush1.msra.mxu0 0.0
        %1078 = vmatprep.subr.mxu0 0.0
        %1079 = vmatpush1.msra.mxu0 0.0
        %1080 = vmatprep.subr.mxu0 0.0
        %1081 = vmatpush1.msra.mxu0 0.0
        %1082 = vmatprep.subr.mxu0 0.0
        %1083 = vmatpush1.msra.mxu0 0.0
        %1084 = vmatprep.mubr.f32.mxu0 0.0
        %1085 = vmatmul.mubr.f32.gmra.mrb[0].mxu0 %v812
        %v1086 = vpop.f32.mrb[0].mxu0
        %v1087 = vadd.f32 %v733, %v1086
        %v1088 = vpop.f32.mrb[0].mxu0
        %v1089 = vadd.f32 %v733, %v1088
        %1090 = vmatprep.mubr.f32.mxu0 0.0
        %1091 = vmatmul.mubr.f32.gmra.mrb[0].mxu0 %v815
        %v1092 = vpop.f32.mrb[0].mxu0
        %v1093 = vadd.f32 %v738, %v1092
        %v1094 = vpop.f32.mrb[0].mxu0
        %v1095 = vadd.f32 %v738, %v1094
        %1096 = vmatprep.mubr.f32.mxu0 0.0
        %1097 = vmatmul.mubr.f32.gmra.mrb[0].mxu0 %v818
        %v1098 = vpop.f32.mrb[0].mxu0
        %v1099 = vadd.f32 %v743, %v1098
        %v1100 = vpop.f32.mrb[0].mxu0
        %v1101 = vadd.f32 %v743, %v1100
        %1102 = vmatprep.mubr.f32.mxu0 0.0
        %1103 = vmatmul.mubr.f32.gmra.mrb[0].mxu0 %v821
        %v1104 = vpop.f32.mrb[0].mxu0
        %v1105 = vadd.f32 %v748, %v1104
        %v1106 = vpop.f32.mrb[0].mxu0
        %v1107 = vadd.f32 %v748, %v1106
        %1108 = vmatprep.mubr.f32.mxu0 0.0
        %1109 = vmatmul.mubr.f32.gmra.mrb[0].mxu0 %v824
        %v1110 = vpop.f32.mrb[0].mxu0
        %v1111 = vadd.f32 %v753, %v1110
        %v1112 = vpop.f32.mrb[0].mxu0
        %v1113 = vadd.f32 %v753, %v1112
        %1114 = vmatprep.mubr.f32.mxu0 0.0
        %1115 = vmatmul.mubr.f32.gmra.mrb[0].mxu0 %v827
        %v1116 = vpop.f32.mrb[0].mxu0
        %v1117 = vadd.f32 %v758, %v1116
        %v1118 = vpop.f32.mrb[0].mxu0
        %v1119 = vadd.f32 %v758, %v1118
        %1120 = vmatprep.mubr.f32.mxu0 0.0
        %1121 = vmatmul.mubr.f32.gmra.mrb[0].mxu0 %v830
        %v1122 = vpop.f32.mrb[0].mxu0
        %v1123 = vadd.f32 %v763, %v1122
        %v1124 = vpop.f32.mrb[0].mxu0
        %v1125 = vadd.f32 %v763, %v1124
        %1126 = vmatprep.mubr.f32.mxu0 0.0
        %1127 = vmatmul.mubr.f32.gmra.mrb[0].mxu0 %v833
        %v1128 = vpop.f32.mrb[0].mxu0
        %v1129 = vadd.f32 %v768, %v1128
        %v1130 = vpop.f32.mrb[0].mxu0
        %v1131 = vadd.f32 %v768, %v1130
        %1132 = vmatprep.mubr.f32.mxu0 0.0
        %1133 = vmatmul.mubr.f32.gmra.mrb[0].mxu0 %v836
        %v1134 = vpop.f32.mrb[0].mxu0
        %v1135 = vadd.f32 %v773, %v1134
        %v1136 = vpop.f32.mrb[0].mxu0
        %v1137 = vadd.f32 %v773, %v1136
        %1138 = vmatprep.mubr.f32.mxu0 0.0
        %1139 = vmatmul.mubr.f32.gmra.mrb[0].mxu0 %v839
        %v1140 = vpop.f32.mrb[0].mxu0
        %v1141 = vadd.f32 %v778, %v1140
        %v1142 = vpop.f32.mrb[0].mxu0
        %v1143 = vadd.f32 %v778, %v1142
        %1144 = vmatprep.mubr.f32.mxu0 0.0
        %1145 = vmatmul.mubr.f32.gmra.mrb[0].mxu0 %v842
        %v1146 = vpop.f32.mrb[0].mxu0
        %v1147 = vadd.f32 %v783, %v1146
        %v1148 = vpop.f32.mrb[0].mxu0
        %v1149 = vadd.f32 %v783, %v1148
        %1150 = vmatprep.mubr.f32.mxu0 0.0
        %1151 = vmatmul.mubr.f32.gmra.mrb[0].mxu0 %v845
        %v1152 = vpop.f32.mrb[0].mxu0
        %v1153 = vadd.f32 %v788, %v1152
        %v1154 = vpop.f32.mrb[0].mxu0
        %v1155 = vadd.f32 %v788, %v1154
        %1156 = vmatprep.mubr.f32.mxu0 0.0
        %1157 = vmatmul.mubr.f32.gmra.mrb[0].mxu0 %v848
        %v1158 = vpop.f32.mrb[0].mxu0
        %v1159 = vadd.f32 %v793, %v1158
        %v1160 = vpop.f32.mrb[0].mxu0
        %v1161 = vadd.f32 %v793, %v1160
        %1162 = vmatprep.mubr.f32.mxu0 0.0
        %1163 = vmatmul.mubr.f32.gmra.mrb[0].mxu0 %v851
        %v1164 = vpop.f32.mrb[0].mxu0
        %v1165 = vadd.f32 %v798, %v1164
        %v1166 = vpop.f32.mrb[0].mxu0
        %v1167 = vadd.f32 %v798, %v1166
        %1168 = vmatprep.mubr.f32.mxu0 0.0
        %1169 = vmatmul.mubr.f32.gmra.mrb[0].mxu0 %v854
        %v1170 = vpop.f32.mrb[0].mxu0
        %v1171 = vadd.f32 %v803, %v1170
        %v1172 = vpop.f32.mrb[0].mxu0
        %v1173 = vadd.f32 %v803, %v1172
        %1174 = vmatprep.mubr.f32.mxu0 0.0
        %1175 = vmatmul.mubr.f32.gmra.mrb[0].mxu0 %v857
        %v1176 = vpop.f32.mrb[0].mxu0
        %v1177 = vadd.f32 %v808, %v1176
        %v1178 = vpop.f32.mrb[0].mxu0
        %v1179 = vadd.f32 %v808, %v1178
        %1180 = vdwg.mxu0
        %v1181 = vmax.f32 %v926, 0.0
        %v1182 = vmax.f32 %v928, 0.0
        %v1183 = vmax.f32 %v1087, 0.0
        %v1184 = vmax.f32 %v1089, 0.0
        %v1185 = vmax.f32 %v932, 0.0
        %v1186 = vmax.f32 %v934, 0.0
        %v1187 = vmax.f32 %v1093, 0.0
        %v1188 = vmax.f32 %v1095, 0.0
        %v1189 = vmax.f32 %v938, 0.0
        %v1190 = vmax.f32 %v940, 0.0
        %v1191 = vmax.f32 %v1099, 0.0
        %v1192 = vmax.f32 %v1101, 0.0
        %v1193 = vmax.f32 %v944, 0.0
        %v1194 = vmax.f32 %v946, 0.0
        %v1195 = vmax.f32 %v1105, 0.0
        %v1196 = vmax.f32 %v1107, 0.0
        %v1197 = vmax.f32 %v950, 0.0
        %v1198 = vmax.f32 %v952, 0.0
        %v1199 = vmax.f32 %v1111, 0.0
        %v1200 = vmax.f32 %v1113, 0.0
        %v1201 = vmax.f32 %v956, 0.0
        %v1202 = vmax.f32 %v958, 0.0
        %v1203 = vmax.f32 %v1117, 0.0
        %v1204 = vmax.f32 %v1119, 0.0
        %v1205 = vmax.f32 %v962, 0.0
        %v1206 = vmax.f32 %v964, 0.0
        %v1207 = vmax.f32 %v1123, 0.0
        %v1208 = vmax.f32 %v1125, 0.0
        %v1209 = vmax.f32 %v968, 0.0
        %v1210 = vmax.f32 %v970, 0.0
        %v1211 = vmax.f32 %v1129, 0.0
        %v1212 = vmax.f32 %v1131, 0.0
        %v1213 = vmax.f32 %v974, 0.0
        %v1214 = vmax.f32 %v976, 0.0
        %v1215 = vmax.f32 %v1135, 0.0
        %v1216 = vmax.f32 %v1137, 0.0
        %v1217 = vmax.f32 %v980, 0.0
        %v1218 = vmax.f32 %v982, 0.0
        %v1219 = vmax.f32 %v1141, 0.0
        %v1220 = vmax.f32 %v1143, 0.0
        %v1221 = vmax.f32 %v986, 0.0
        %v1222 = vmax.f32 %v988, 0.0
        %v1223 = vmax.f32 %v1147, 0.0
        %v1224 = vmax.f32 %v1149, 0.0
        %v1225 = vmax.f32 %v992, 0.0
        %v1226 = vmax.f32 %v994, 0.0
        %v1227 = vmax.f32 %v1153, 0.0
        %v1228 = vmax.f32 %v1155, 0.0
        %v1229 = vmax.f32 %v998, 0.0
        %v1230 = vmax.f32 %v1000, 0.0
        %v1231 = vmax.f32 %v1159, 0.0
        %v1232 = vmax.f32 %v1161, 0.0
        %v1233 = vmax.f32 %v1004, 0.0
        %v1234 = vmax.f32 %v1006, 0.0
        %v1235 = vmax.f32 %v1165, 0.0
        %v1236 = vmax.f32 %v1167, 0.0
        %v1237 = vmax.f32 %v1010, 0.0
        %v1238 = vmax.f32 %v1012, 0.0
        %v1239 = vmax.f32 %v1171, 0.0
        %v1240 = vmax.f32 %v1173, 0.0
        %v1241 = vmax.f32 %v1016, 0.0
        %v1242 = vmax.f32 %v1018, 0.0
        %v1243 = vmax.f32 %v1177, 0.0
        %v1244 = vmax.f32 %v1179, 0.0
        %v1245 = vld [vmem:[%s5] sm:$0xff]
        %v1246 = vld [vmem:[%s5 + $0x8] sm:$0xff]
        %v1247 = vld [vmem:[%s5 + $0x10] sm:$0xff]
        %v1248 = vld [vmem:[%s5 + $0x18] sm:$0xff]
        %v1249 = vld [vmem:[%s5 + $0x20] sm:$0xff]
        %v1250 = vld [vmem:[%s5 + $0x28] sm:$0xff]
        %v1251 = vld [vmem:[%s5 + $0x30] sm:$0xff]
        %v1252 = vld [vmem:[%s5 + $0x38] sm:$0xff]
        %v1253 = vld [vmem:[%s6] sm:$0xff]
        %v1254 = vld [vmem:[%s6 + $0x8] sm:$0xff]
        %v1255 = vld [vmem:[%s6 + $0x10] sm:$0xff]
        %v1256 = vld [vmem:[%s6 + $0x18] sm:$0xff]
        %v1257 = vld [vmem:[%s6 + $0x20] sm:$0xff]
        %v1258 = vld [vmem:[%s6 + $0x28] sm:$0xff]
        %v1259 = vld [vmem:[%s6 + $0x30] sm:$0xff]
        %v1260 = vld [vmem:[%s6 + $0x38] sm:$0xff]
        %1262 = vset.pattern.permute.xlu0 0
        %1263 = vperm.xlu0 %1262, %v1253
        %v1264 = vpop.permute.xlu0 %1263
        %1267 = vset.pattern.permute.xlu0 0
        %1268 = vperm.xlu0 %1267, %v1254
        %v1269 = vpop.permute.xlu0 %1268
        %1272 = vset.pattern.permute.xlu0 0
        %1273 = vperm.xlu0 %1272, %v1255
        %v1274 = vpop.permute.xlu0 %1273
        %1277 = vset.pattern.permute.xlu0 0
        %1278 = vperm.xlu0 %1277, %v1256
        %v1279 = vpop.permute.xlu0 %1278
        %1282 = vset.pattern.permute.xlu0 0
        %1283 = vperm.xlu0 %1282, %v1257
        %v1284 = vpop.permute.xlu0 %1283
        %1287 = vset.pattern.permute.xlu0 0
        %1288 = vperm.xlu0 %1287, %v1258
        %v1289 = vpop.permute.xlu0 %1288
        %1292 = vset.pattern.permute.xlu0 0
        %1293 = vperm.xlu0 %1292, %v1259
        %v1294 = vpop.permute.xlu0 %1293
        %1297 = vset.pattern.permute.xlu0 0
        %1298 = vperm.xlu0 %1297, %v1260
        %v1299 = vpop.permute.xlu0 %1298
        %1301 = vmatprep.subr.mxu0 %v1182
        %1302 = vmatpush1.msra.mxu0 %v1181
        %1303 = vmatprep.subr.mxu0 %v1186
        %1304 = vmatpush1.msra.mxu0 %v1185
        %1305 = vmatprep.subr.mxu0 %v1190
        %1306 = vmatpush1.msra.mxu0 %v1189
        %1307 = vmatprep.subr.mxu0 %v1194
        %1308 = vmatpush1.msra.mxu0 %v1193
        %1309 = vmatprep.subr.mxu0 %v1198
        %1310 = vmatpush1.msra.mxu0 %v1197
        %1311 = vmatprep.subr.mxu0 %v1202
        %1312 = vmatpush1.msra.mxu0 %v1201
        %1313 = vmatprep.subr.mxu0 %v1206
        %1314 = vmatpush1.msra.mxu0 %v1205
        %1315 = vmatprep.subr.mxu0 %v1210
        %1316 = vmatpush1.msra.mxu0 %v1209
        %1317 = vmatprep.subr.mxu0 %v1214
        %1318 = vmatpush1.msra.mxu0 %v1213
        %1319 = vmatprep.subr.mxu0 %v1218
        %1320 = vmatpush1.msra.mxu0 %v1217
        %1321 = vmatprep.subr.mxu0 %v1222
        %1322 = vmatpush1.msra.mxu0 %v1221
        %1323 = vmatprep.subr.mxu0 %v1226
        %1324 = vmatpush1.msra.mxu0 %v1225
        %1325 = vmatprep.subr.mxu0 %v1230
        %1326 = vmatpush1.msra.mxu0 %v1229
        %1327 = vmatprep.subr.mxu0 %v1234
        %1328 = vmatpush1.msra.mxu0 %v1233
        %1329 = vmatprep.subr.mxu0 %v1238
        %1330 = vmatpush1.msra.mxu0 %v1237
        %1331 = vmatprep.subr.mxu0 %v1242
        %1332 = vmatpush1.msra.mxu0 %v1241
        %1333 = vmatprep.subr.mxu0 0.0
        %1334 = vmatpush1.msra.mxu0 0.0
        %1335 = vmatprep.subr.mxu0 0.0
        %1336 = vmatpush1.msra.mxu0 0.0
        %1337 = vmatprep.subr.mxu0 0.0
        %1338 = vmatpush1.msra.mxu0 0.0
        %1339 = vmatprep.subr.mxu0 0.0
        %1340 = vmatpush1.msra.mxu0 0.0
        %1341 = vmatprep.subr.mxu0 0.0
        %1342 = vmatpush1.msra.mxu0 0.0
        %1343 = vmatprep.subr.mxu0 0.0
        %1344 = vmatpush1.msra.mxu0 0.0
        %1345 = vmatprep.subr.mxu0 0.0
        %1346 = vmatpush1.msra.mxu0 0.0
        %1347 = vmatprep.subr.mxu0 0.0
        %1348 = vmatpush1.msra.mxu0 0.0
        %1349 = vmatprep.subr.mxu0 0.0
        %1350 = vmatpush1.msra.mxu0 0.0
        %1351 = vmatprep.subr.mxu0 0.0
        %1352 = vmatpush1.msra.mxu0 0.0
        %1353 = vmatprep.subr.mxu0 0.0
        %1354 = vmatpush1.msra.mxu0 0.0
        %1355 = vmatprep.subr.mxu0 0.0
        %1356 = vmatpush1.msra.mxu0 0.0
        %1357 = vmatprep.subr.mxu0 0.0
        %1358 = vmatpush1.msra.mxu0 0.0
        %1359 = vmatprep.subr.mxu0 0.0
        %1360 = vmatpush1.msra.mxu0 0.0
        %1361 = vmatprep.subr.mxu0 0.0
        %1362 = vmatpush1.msra.mxu0 0.0
        %1363 = vmatprep.subr.mxu0 0.0
        %1364 = vmatpush1.msra.mxu0 0.0
        %1365 = vmatprep.mubr.f32.mxu0 0.0
        %1366 = vmatmul.mubr.f32.gmra.mrb[0].mxu0 %v1245
        %v1367 = vpop.f32.mrb[0].mxu0
        %v1368 = vadd.f32 %v1264, %v1367
        %v1369 = vpop.f32.mrb[0].mxu0
        %v1370 = vadd.f32 %v1264, %v1369
        %1371 = vmatprep.mubr.f32.mxu0 0.0
        %1372 = vmatmul.mubr.f32.gmra.mrb[0].mxu0 %v1246
        %v1373 = vpop.f32.mrb[0].mxu0
        %v1374 = vadd.f32 %v1269, %v1373
        %v1375 = vpop.f32.mrb[0].mxu0
        %v1376 = vadd.f32 %v1269, %v1375
        %1377 = vmatprep.mubr.f32.mxu0 0.0
        %1378 = vmatmul.mubr.f32.gmra.mrb[0].mxu0 %v1247
        %v1379 = vpop.f32.mrb[0].mxu0
        %v1380 = vadd.f32 %v1274, %v1379
        %v1381 = vpop.f32.mrb[0].mxu0
        %v1382 = vadd.f32 %v1274, %v1381
        %1383 = vmatprep.mubr.f32.mxu0 0.0
        %1384 = vmatmul.mubr.f32.gmra.mrb[0].mxu0 %v1248
        %v1385 = vpop.f32.mrb[0].mxu0
        %v1386 = vadd.f32 %v1279, %v1385
        %v1387 = vpop.f32.mrb[0].mxu0
        %v1388 = vadd.f32 %v1279, %v1387
        %1389 = vmatprep.mubr.f32.mxu0 0.0
        %1390 = vmatmul.mubr.f32.gmra.mrb[0].mxu0 %v1249
        %v1391 = vpop.f32.mrb[0].mxu0
        %v1392 = vadd.f32 %v1284, %v1391
        %v1393 = vpop.f32.mrb[0].mxu0
        %v1394 = vadd.f32 %v1284, %v1393
        %1395 = vmatprep.mubr.f32.mxu0 0.0
        %1396 = vmatmul.mubr.f32.gmra.mrb[0].mxu0 %v1250
        %v1397 = vpop.f32.mrb[0].mxu0
        %v1398 = vadd.f32 %v1289, %v1397
        %v1399 = vpop.f32.mrb[0].mxu0
        %v1400 = vadd.f32 %v1289, %v1399
        %1401 = vmatprep.mubr.f32.mxu0 0.0
        %1402 = vmatmul.mubr.f32.gmra.mrb[0].mxu0 %v1251
        %v1403 = vpop.f32.mrb[0].mxu0
        %v1404 = vadd.f32 %v1294, %v1403
        %v1405 = vpop.f32.mrb[0].mxu0
        %v1406 = vadd.f32 %v1294, %v1405
        %1407 = vmatprep.mubr.f32.mxu0 0.0
        %1408 = vmatmul.mubr.f32.gmra.mrb[0].mxu0 %v1252
        %v1409 = vpop.f32.mrb[0].mxu0
        %v1410 = vadd.f32 %v1299, %v1409
        %v1411 = vpop.f32.mrb[0].mxu0
        %v1412 = vadd.f32 %v1299, %v1411
        %1413 = vdwg.mxu0
        %1414 = vmatprep.subr.mxu0 %v1184
        %1415 = vmatpush1.msra.mxu0 %v1183
        %1416 = vmatprep.subr.mxu0 %v1188
        %1417 = vmatpush1.msra.mxu0 %v1187
        %1418 = vmatprep.subr.mxu0 %v1192
        %1419 = vmatpush1.msra.mxu0 %v1191
        %1420 = vmatprep.subr.mxu0 %v1196
        %1421 = vmatpush1.msra.mxu0 %v1195
        %1422 = vmatprep.subr.mxu0 %v1200
        %1423 = vmatpush1.msra.mxu0 %v1199
        %1424 = vmatprep.subr.mxu0 %v1204
        %1425 = vmatpush1.msra.mxu0 %v1203
        %1426 = vmatprep.subr.mxu0 %v1208
        %1427 = vmatpush1.msra.mxu0 %v1207
        %1428 = vmatprep.subr.mxu0 %v1212
        %1429 = vmatpush1.msra.mxu0 %v1211
        %1430 = vmatprep.subr.mxu0 %v1216
        %1431 = vmatpush1.msra.mxu0 %v1215
        %1432 = vmatprep.subr.mxu0 %v1220
        %1433 = vmatpush1.msra.mxu0 %v1219
        %1434 = vmatprep.subr.mxu0 %v1224
        %1435 = vmatpush1.msra.mxu0 %v1223
        %1436 = vmatprep.subr.mxu0 %v1228
        %1437 = vmatpush1.msra.mxu0 %v1227
        %1438 = vmatprep.subr.mxu0 %v1232
        %1439 = vmatpush1.msra.mxu0 %v1231
        %1440 = vmatprep.subr.mxu0 %v1236
        %1441 = vmatpush1.msra.mxu0 %v1235
        %1442 = vmatprep.subr.mxu0 %v1240
        %1443 = vmatpush1.msra.mxu0 %v1239
        %1444 = vmatprep.subr.mxu0 %v1244
        %1445 = vmatpush1.msra.mxu0 %v1243
        %1446 = vmatprep.subr.mxu0 0.0
        %1447 = vmatpush1.msra.mxu0 0.0
        %1448 = vmatprep.subr.mxu0 0.0
        %1449 = vmatpush1.msra.mxu0 0.0
        %1450 = vmatprep.subr.mxu0 0.0
        %1451 = vmatpush1.msra.mxu0 0.0
        %1452 = vmatprep.subr.mxu0 0.0
        %1453 = vmatpush1.msra.mxu0 0.0
        %1454 = vmatprep.subr.mxu0 0.0
        %1455 = vmatpush1.msra.mxu0 0.0
        %1456 = vmatprep.subr.mxu0 0.0
        %1457 = vmatpush1.msra.mxu0 0.0
        %1458 = vmatprep.subr.mxu0 0.0
        %1459 = vmatpush1.msra.mxu0 0.0
        %1460 = vmatprep.subr.mxu0 0.0
        %1461 = vmatpush1.msra.mxu0 0.0
        %1462 = vmatprep.subr.mxu0 0.0
        %1463 = vmatpush1.msra.mxu0 0.0
        %1464 = vmatprep.subr.mxu0 0.0
        %1465 = vmatpush1.msra.mxu0 0.0
        %1466 = vmatprep.subr.mxu0 0.0
        %1467 = vmatpush1.msra.mxu0 0.0
        %1468 = vmatprep.subr.mxu0 0.0
        %1469 = vmatpush1.msra.mxu0 0.0
        %1470 = vmatprep.subr.mxu0 0.0
        %1471 = vmatpush1.msra.mxu0 0.0
        %1472 = vmatprep.subr.mxu0 0.0
        %1473 = vmatpush1.msra.mxu0 0.0
        %1474 = vmatprep.subr.mxu0 0.0
        %1475 = vmatpush1.msra.mxu0 0.0
        %1476 = vmatprep.subr.mxu0 0.0
        %1477 = vmatpush1.msra.mxu0 0.0
        %1478 = vmatprep.mubr.f32.mxu0 0.0
        %1479 = vmatmul.mubr.f32.gmra.mrb[0].mxu0 %v1245
        %v1480 = vpop.f32.mrb[0].mxu0
        %v1481 = vadd.f32 %v1264, %v1480
        %v1482 = vpop.f32.mrb[0].mxu0
        %v1483 = vadd.f32 %v1264, %v1482
        %1484 = vmatprep.mubr.f32.mxu0 0.0
        %1485 = vmatmul.mubr.f32.gmra.mrb[0].mxu0 %v1246
        %v1486 = vpop.f32.mrb[0].mxu0
        %v1487 = vadd.f32 %v1269, %v1486
        %v1488 = vpop.f32.mrb[0].mxu0
        %v1489 = vadd.f32 %v1269, %v1488
        %1490 = vmatprep.mubr.f32.mxu0 0.0
        %1491 = vmatmul.mubr.f32.gmra.mrb[0].mxu0 %v1247
        %v1492 = vpop.f32.mrb[0].mxu0
        %v1493 = vadd.f32 %v1274, %v1492
        %v1494 = vpop.f32.mrb[0].mxu0
        %v1495 = vadd.f32 %v1274, %v1494
        %1496 = vmatprep.mubr.f32.mxu0 0.0
        %1497 = vmatmul.mubr.f32.gmra.mrb[0].mxu0 %v1248
        %v1498 = vpop.f32.mrb[0].mxu0
        %v1499 = vadd.f32 %v1279, %v1498
        %v1500 = vpop.f32.mrb[0].mxu0
        %v1501 = vadd.f32 %v1279, %v1500
        %1502 = vmatprep.mubr.f32.mxu0 0.0
        %1503 = vmatmul.mubr.f32.gmra.mrb[0].mxu0 %v1249
        %v1504 = vpop.f32.mrb[0].mxu0
        %v1505 = vadd.f32 %v1284, %v1504
        %v1506 = vpop.f32.mrb[0].mxu0
        %v1507 = vadd.f32 %v1284, %v1506
        %1508 = vmatprep.mubr.f32.mxu0 0.0
        %1509 = vmatmul.mubr.f32.gmra.mrb[0].mxu0 %v1250
        %v1510 = vpop.f32.mrb[0].mxu0
        %v1511 = vadd.f32 %v1289, %v1510
        %v1512 = vpop.f32.mrb[0].mxu0
        %v1513 = vadd.f32 %v1289, %v1512
        %1514 = vmatprep.mubr.f32.mxu0 0.0
        %1515 = vmatmul.mubr.f32.gmra.mrb[0].mxu0 %v1251
        %v1516 = vpop.f32.mrb[0].mxu0
        %v1517 = vadd.f32 %v1294, %v1516
        %v1518 = vpop.f32.mrb[0].mxu0
        %v1519 = vadd.f32 %v1294, %v1518
        %1520 = vmatprep.mubr.f32.mxu0 0.0
        %1521 = vmatmul.mubr.f32.gmra.mrb[0].mxu0 %v1252
        %v1522 = vpop.f32.mrb[0].mxu0
        %v1523 = vadd.f32 %v1299, %v1522
        %v1524 = vpop.f32.mrb[0].mxu0
        %v1525 = vadd.f32 %v1299, %v1524
        %1526 = vdwg.mxu0
        %v1527 = vmax.f32 %v1368, 0.0
        %v1528 = vmax.f32 %v1370, 0.0
        %v1529 = vmax.f32 %v1481, 0.0
        %v1530 = vmax.f32 %v1483, 0.0
        %v1531 = vmax.f32 %v1374, 0.0
        %v1532 = vmax.f32 %v1376, 0.0
        %v1533 = vmax.f32 %v1487, 0.0
        %v1534 = vmax.f32 %v1489, 0.0
        %v1535 = vmax.f32 %v1380, 0.0
        %v1536 = vmax.f32 %v1382, 0.0
        %v1537 = vmax.f32 %v1493, 0.0
        %v1538 = vmax.f32 %v1495, 0.0
        %v1539 = vmax.f32 %v1386, 0.0
        %v1540 = vmax.f32 %v1388, 0.0
        %v1541 = vmax.f32 %v1499, 0.0
        %v1542 = vmax.f32 %v1501, 0.0
        %v1543 = vmax.f32 %v1392, 0.0
        %v1544 = vmax.f32 %v1394, 0.0
        %v1545 = vmax.f32 %v1505, 0.0
        %v1546 = vmax.f32 %v1507, 0.0
        %v1547 = vmax.f32 %v1398, 0.0
        %v1548 = vmax.f32 %v1400, 0.0
        %v1549 = vmax.f32 %v1511, 0.0
        %v1550 = vmax.f32 %v1513, 0.0
        %v1551 = vmax.f32 %v1404, 0.0
        %v1552 = vmax.f32 %v1406, 0.0
        %v1553 = vmax.f32 %v1517, 0.0
        %v1554 = vmax.f32 %v1519, 0.0
        %v1555 = vmax.f32 %v1410, 0.0
        %v1556 = vmax.f32 %v1412, 0.0
        %v1557 = vmax.f32 %v1523, 0.0
        %v1558 = vmax.f32 %v1525, 0.0
        %v1559 = vld [vmem:[%s7] sm:$0xff]
        %v1560 = vld [vmem:[%s7 + $0x8] sm:$0xff]
        %v1561 = vld [vmem:[%s7 + $0x10] sm:$0xff]
        %v1562 = vld [vmem:[%s7 + $0x18] sm:$0xff]
        %v1563 = vld [vmem:[%s7 + $0x20] sm:$0xff]
        %v1564 = vld [vmem:[%s7 + $0x28] sm:$0xff]
        %v1565 = vld [vmem:[%s7 + $0x30] sm:$0xff]
        %v1566 = vld [vmem:[%s7 + $0x38] sm:$0xff]
        %1568 = vset.pattern.permute.xlu0 0
        %1569 = vperm.xlu0 %1568, %v1559
        %v1570 = vpop.permute.xlu0 %1569
        %1573 = vset.pattern.permute.xlu0 0
        %1574 = vperm.xlu0 %1573, %v1560
        %v1575 = vpop.permute.xlu0 %1574
        %1578 = vset.pattern.permute.xlu0 0
        %1579 = vperm.xlu0 %1578, %v1561
        %v1580 = vpop.permute.xlu0 %1579
        %1583 = vset.pattern.permute.xlu0 0
        %1584 = vperm.xlu0 %1583, %v1562
        %v1585 = vpop.permute.xlu0 %1584
        %1588 = vset.pattern.permute.xlu0 0
        %1589 = vperm.xlu0 %1588, %v1563
        %v1590 = vpop.permute.xlu0 %1589
        %1593 = vset.pattern.permute.xlu0 0
        %1594 = vperm.xlu0 %1593, %v1564
        %v1595 = vpop.permute.xlu0 %1594
        %1598 = vset.pattern.permute.xlu0 0
        %1599 = vperm.xlu0 %1598, %v1565
        %v1600 = vpop.permute.xlu0 %1599
        %1603 = vset.pattern.permute.xlu0 0
        %1604 = vperm.xlu0 %1603, %v1566
        %v1605 = vpop.permute.xlu0 %1604
        %v1607 = vmul.f32 %v1527, %v1570
        %v1608 = vmul.f32 %v1528, %v1570
        %v1609 = vmul.f32 %v1529, %v1570
        %v1610 = vmul.f32 %v1530, %v1570
        %v1611 = vmul.f32 %v1531, %v1575
        %v1612 = vmul.f32 %v1532, %v1575
        %v1613 = vmul.f32 %v1533, %v1575
        %v1614 = vmul.f32 %v1534, %v1575
        %v1615 = vmul.f32 %v1535, %v1580
        %v1616 = vmul.f32 %v1536, %v1580
        %v1617 = vmul.f32 %v1537, %v1580
        %v1618 = vmul.f32 %v1538, %v1580
        %v1619 = vmul.f32 %v1539, %v1585
        %v1620 = vmul.f32 %v1540, %v1585
        %v1621 = vmul.f32 %v1541, %v1585
        %v1622 = vmul.f32 %v1542, %v1585
        %v1623 = vmul.f32 %v1543, %v1590
        %v1624 = vmul.f32 %v1544, %v1590
        %v1625 = vmul.f32 %v1545, %v1590
        %v1626 = vmul.f32 %v1546, %v1590
        %v1627 = vmul.f32 %v1547, %v1595
        %v1628 = vmul.f32 %v1548, %v1595
        %v1629 = vmul.f32 %v1549, %v1595
        %v1630 = vmul.f32 %v1550, %v1595
        %v1631 = vmul.f32 %v1551, %v1600
        %v1632 = vmul.f32 %v1552, %v1600
        %v1633 = vmul.f32 %v1553, %v1600
        %v1634 = vmul.f32 %v1554, %v1600
        %v1635 = vmul.f32 %v1555, %v1605
        %v1636 = vmul.f32 %v1556, %v1605
        %v1637 = vmul.f32 %v1557, %v1605
        %v1638 = vmul.f32 %v1558, %v1605
        %v1639 = vadd.f32 %v1607, %v1611
        %v1640 = vadd.f32 %v1639, %v1615
        %v1641 = vadd.f32 %v1640, %v1619
        %v1642 = vadd.f32 %v1641, %v1623
        %v1643 = vadd.f32 %v1642, %v1627
        %v1644 = vadd.f32 %v1643, %v1631
        %v1645 = vadd.f32 %v1644, %v1635
        %v1646 = vrot.slane %v1645, 4
        %v1647 = vadd.f32 %v1645, %v1646
        %v1648 = vrot.slane %v1647, 2
        %v1649 = vadd.f32 %v1647, %v1648
        %v1650 = vrot.slane %v1649, 1
        %v1651 = vadd.f32 %v1649, %v1650
        %v1652 = vadd.f32 %v1608, %v1612
        %v1653 = vadd.f32 %v1652, %v1616
        %v1654 = vadd.f32 %v1653, %v1620
        %v1655 = vadd.f32 %v1654, %v1624
        %v1656 = vadd.f32 %v1655, %v1628
        %v1657 = vadd.f32 %v1656, %v1632
        %v1658 = vadd.f32 %v1657, %v1636
        %v1659 = vrot.slane %v1658, 4
        %v1660 = vadd.f32 %v1658, %v1659
        %v1661 = vrot.slane %v1660, 2
        %v1662 = vadd.f32 %v1660, %v1661
        %v1663 = vrot.slane %v1662, 1
        %v1664 = vadd.f32 %v1662, %v1663
        %v1665 = vadd.f32 %v1609, %v1613
        %v1666 = vadd.f32 %v1665, %v1617
        %v1667 = vadd.f32 %v1666, %v1621
        %v1668 = vadd.f32 %v1667, %v1625
        %v1669 = vadd.f32 %v1668, %v1629
        %v1670 = vadd.f32 %v1669, %v1633
        %v1671 = vadd.f32 %v1670, %v1637
        %v1672 = vrot.slane %v1671, 4
        %v1673 = vadd.f32 %v1671, %v1672
        %v1674 = vrot.slane %v1673, 2
        %v1675 = vadd.f32 %v1673, %v1674
        %v1676 = vrot.slane %v1675, 1
        %v1677 = vadd.f32 %v1675, %v1676
        %v1678 = vadd.f32 %v1610, %v1614
        %v1679 = vadd.f32 %v1678, %v1618
        %v1680 = vadd.f32 %v1679, %v1622
        %v1681 = vadd.f32 %v1680, %v1626
        %v1682 = vadd.f32 %v1681, %v1630
        %v1683 = vadd.f32 %v1682, %v1634
        %v1684 = vadd.f32 %v1683, %v1638
        %v1685 = vrot.slane %v1684, 4
        %v1686 = vadd.f32 %v1684, %v1685
        %v1687 = vrot.slane %v1686, 2
        %v1688 = vadd.f32 %v1686, %v1687
        %v1689 = vrot.slane %v1688, 1
        %v1690 = vadd.f32 %v1688, %v1689
        %v1691 = vld [vmem:[#allocation2] sm:$0x1]
        %1693 = vset.pattern.permute.xlu0 0
        %1694 = vperm.xlu0 %1693, %v1691
        %v1695 = vpop.permute.xlu0 %1694
        %v1697 = vlaneseq
        %v1698 = vshrl.u32 %v1697, 7
        %v1699 = vsub.s32 0, %v1698
        %v1700 = vrot.slane %v1695, %v1699
        %v1701 = vadd.f32 %v1651, %v1700
        %v1702 = vadd.f32 %v1664, %v1700
        %v1703 = vadd.f32 %v1677, %v1700
        %v1704 = vadd.f32 %v1690, %v1700
        %v1705 = vxor.u32 %v1701, 2147483648
        %v1706 = vxor.u32 %v1702, 2147483648
        %v1707 = vxor.u32 %v1703, 2147483648
        %v1708 = vxor.u32 %v1704, 2147483648
        %v1709 = vmul.f32 %v1705, 1.442695
        %v1710 = vpow.pop %v1709
        %v1711 = vmul.f32 %v1706, 1.442695
        %v1712 = vpow.pop %v1711
        %v1713 = vmul.f32 %v1707, 1.442695
        %v1714 = vpow.pop %v1713
        %v1715 = vmul.f32 %v1708, 1.442695
        %v1716 = vpow.pop %v1715
        %v1717 = vadd.f32 %v1710, 1.0
        %v1718 = vadd.f32 %v1712, 1.0
        %v1719 = vadd.f32 %v1714, 1.0
        %v1720 = vadd.f32 %v1716, 1.0
        %v1721 = vrcp.pop %v1717
        %v1722 = vmul.f32 1.0, %v1721
        %v1723 = vrcp.pop %v1718
        %v1724 = vmul.f32 1.0, %v1723
        %v1725 = vrcp.pop %v1719
        %v1726 = vmul.f32 1.0, %v1725
        %v1727 = vrcp.pop %v1720
        %v1728 = vmul.f32 1.0, %v1727
        %v1733 = vcombine.low %v1722, %v1724
        %v1734 = vcombine.low %v1726, %v1728
        %v1736 = vunpack.c.l.s4 1966171168
        %v1737 = vunpack.c.0.s8 %v1736
        %v1738 = vlaneseq
        %v1739 = vshrl.u32 %v1738, 7
        %v1740 = vsub.s32 %v1737, %v1739
        %v1741 = vrot.slane %v1733, %v1740
        %v1743 = vunpack.c.l.s4 1966171168
        %v1744 = vunpack.c.0.s8 %v1743
        %v1745 = vlaneseq
        %v1746 = vshrl.u32 %v1745, 7
        %v1747 = vsub.s32 %v1744, %v1746
        %v1748 = vrot.slane %v1734, %v1747
        %v1749 = vcombine.low %v1741, %v1748
        %v1751 = vunpack.c.l.s4 1966171168
        %v1752 = vunpack.c.0.s8 %v1751
        %v1753 = vlaneseq
        %v1754 = vshrl.u32 %v1753, 7
        %v1755 = vsub.s32 %v1752, %v1754
        %v1756 = vrot.slane %v1749, %v1755
        %v1758 = vlaneseq
        %vm1759 = vcmp.ge.s32.totalorder %v1758, 0
        %vm1760 = vcmp.lt.s32.totalorder %v1758, 512
        %vm1761 = vmand %vm1759, %vm1760
        %1762 = vst.msk [vmem:[%s328] sm:$0xf] %vm1761, %v1756
        %s1763 = sand.u32 %s227, 1
        %s1764 = scalar_lea.sflag [#allocation4], %s1763
        %s1765 = sand.u32 %s227, 1
        %s1766 = smul.addr %s1765, 4
        %s1767 = scalar_lea.vmem [#allocation3], %s1766
        // Predicated region
        $region57: #{tpu_custom_call.1} parent=55 // pred_check
          %p1768 = pneg %p237
        $region58: #{tpu_custom_call.1} parent=55 // pred_check_branch
          %1770 = sbr.rel (%p1768) target = $region60
        $region59: #{tpu_custom_call.1} parent=55 // pred_region
          %s1771 = smul.u32 4, %s25
          %s1773 = ssub.s32 64, 64
          %1774 = vsyncadd %s1764, %s1773
          %s1775 = smul.addr %s1771, 16
          %s1776 = scalar_lea.hbm %s9, %s1775
          %s1778 = sshll.u32 %s1767, 4
          %s1779 = int_to_ptr.vmem [resolvable:$true] %s1778
          %1781 = dma.vmem_to_hbm [thread:$0]  %s1779, 64, %s1776, %s1764
        $region60: #{tpu_custom_call.1} parent=55 // pred_fallthru
          _
      $region56: #{tpu_custom_call.1} parent=5 // pred_fallthru
        _
      %p1782 = scmp.le.s32.totalorder 2, %s20
      // Predicated region
      $region61: #{tpu_custom_call.1} parent=5 // pred_check
        %p1783 = pneg %p1782
      $region62: #{tpu_custom_call.1} parent=5 // pred_check_branch
        %1785 = sbr.rel (%p1783) target = $region64
      $region63: #{tpu_custom_call.1} parent=5 // pred_region
        %s1786 = ssub.s32 %s20, 2
        // Predicated region
        $region65: #{tpu_custom_call.1} parent=63 // pred_check
          %p1787 = pneg %p243
        $region66: #{tpu_custom_call.1} parent=63 // pred_check_branch
          %1789 = sbr.rel (%p1787) target = $region68
        $region67: #{tpu_custom_call.1} parent=63 // pred_region
          %s1790 = sand.u32 %s228, 1
          %s1791 = scalar_lea.sflag [#allocation4], %s1790
          %s1792 = sand.u32 %s228, 1
          %s1793 = smul.addr %s1792, 4
          %s1794 = scalar_lea.vmem [#allocation3], %s1793
          %1795 = dma.done %s1791, 64
        $region68: #{tpu_custom_call.1} parent=63 // pred_fallthru
          _
      $region64: #{tpu_custom_call.1} parent=5 // pred_fallthru
        _
    $region6: #{tpu_custom_call.1} parent=1 // loop_footer
      %s24 = sadd.s32 1, %s20
    $region7: #{tpu_custom_call.1} parent=1 // loop_footer_branch
      %19 = sbr.rel target = $region3
    $region8: #{tpu_custom_call.1} parent=1 // loop_exit
      _
    %1796 = vsyncpa [#allocation4], 1
    %s1797 = scalar_lea.sflag [#allocation4], 1
    %1798 = vsyncpa %s1797, 1

</llo_original>
